<compile_context>
chip_gen: v7x
topology: tpu7x:2x2x1
jax: 0.10.0
libtpu: 0.0.40
codegen_flags: <defaults>
</compile_context>

<pallas_src>
import math

import jax
import jax.numpy as jnp
from jax.experimental import pallas as pl

EPS = 1e-12
NEG_FILL = -10000.0
# literal reproduction of `batch_size, head, length, d_tensor = (0, 0, 0, 0)`
SCORE_DENOM = math.sqrt(0)  # == 0.0


def _make_kernel(has_enc, has_trg, has_src, BH, L, D):
    S = 2 * BH * L  # total number of (pair, b, h, l) rows

    def layer_norm_rows(t):  # t: (rows, D)
        mean = jnp.mean(t, axis=-1, keepdims=True)
        var = jnp.mean((t - mean) ** 2, axis=-1, keepdims=True)  # unbiased=False
        return (t - mean) * jax.lax.rsqrt(var + EPS)              # EUP rsqrt

    def kernel(*refs):
        idx = 0

        def nxt():
            nonlocal idx
            r = refs[idx]
            idx += 1
            return r

        dec_ref = nxt()
        trg_ref = nxt() if has_trg else None
        src_ref = nxt() if (has_enc and has_src) else None
        we1, be1, wx1, bx1 = nxt(), nxt(), nxt(), nxt()
        if has_enc:
            we2, be2, wx2, bx2 = nxt(), nxt(), nxt(), nxt()
        w1, b1, w2, b2 = nxt(), nxt(), nxt(), nxt()
        out_ref = nxt()

        dec = dec_ref[...]                                        # (2, BH, L, D)
        trg_mz = trg_ref[...] if trg_ref is not None else None    # (BH, L, L) int32
        src_mz = src_ref[...] if src_ref is not None else None

        def mha(p_pair, we, be, wx, bx, mz):
            x = p_pair[0]                                         # (BH, L, D)
            g = p_pair[1]                                         # (BH, L, D)
            # single GEMM over all BH*L rows for each projection (bias added once)
            e_tild = (jnp.dot(g.reshape(BH * L, D), we[...],
                              preferred_element_type=jnp.float32)
                      + be[...]).reshape(BH, L, D)
            x_tild = (jnp.dot(x.reshape(BH * L, D), wx[...],
                              preferred_element_type=jnp.float32)
                      + bx[...]).reshape(BH, L, D)
            # batched per-(b,h) score / softmax / context
            score = jnp.einsum("bld,bmd->blm", g, e_tild,
                               preferred_element_type=jnp.float32)
            score = score / SCORE_DENOM                           # faithful sqrt(0)
            if mz is not None:
                score = jnp.where(mz != 0, NEG_FILL, score)
            score = score - jnp.max(score, axis=-1, keepdims=True)
            num = jnp.exp(score)
            den = jnp.sum(num, axis=-1, keepdims=True)
            attn = num * pl.reciprocal(den, approx=True)          # EUP, no divide
            return jnp.einsum("blm,bmd->bld", attn, x_tild,
                              preferred_element_type=jnp.float32)

        # ---- self attention + dropout1(identity) + add & norm ----
        a1 = mha(dec, we1, be1, wx1, bx1, trg_mz)                 # (BH, L, D)
        p_flat = layer_norm_rows((a1[jnp.newaxis] + dec).reshape(S, D))

        # ---- encoder-decoder attention (gated only by `enc is not None`) ----
        if has_enc:
            p4 = p_flat.reshape(2, BH, L, D)
            a2 = mha(p4, we2, be2, wx2, bx2, src_mz)
            p_flat = layer_norm_rows((a2[jnp.newaxis] + p4).reshape(S, D))

        # ---- position-wise FFN + dropout3(identity) + add & norm ----
        h = jnp.maximum(
            jnp.dot(p_flat, w1[...], preferred_element_type=jnp.float32) + b1[...],
            0.0)
        f = jnp.dot(h, w2[...], preferred_element_type=jnp.float32) + b2[...]
        out_ref[...] = layer_norm_rows(f + p_flat)   # one contiguous (S, D) store

    return kernel


def decoder_layer_pallas(dec, enc, trg_mask, src_mask, params):
    two, B, H, L, D = dec.shape
    assert two == 2, "layout requires the leading 'pair' axis to have size 2"
    BH = B * H
    S = 2 * BH * L
    dec_f = dec.reshape(2, BH, L, D).astype(jnp.float32)

    has_enc = enc is not None
    has_trg = trg_mask is not None
    has_src = src_mask is not None

    inputs = [dec_f]

    def mask_zero(m):
        # hoist `mask == 0` out of the kernel (no in-kernel float compare)
        # and pass a single int32 copy instead of H duplicated f32 copies.
        mz = jnp.broadcast_to(m, (B, H, L, L))
        return (mz == 0).astype(jnp.int32).reshape(BH, L, L)

    if has_trg:
        inputs.append(mask_zero(trg_mask))
    if has_enc and has_src:
        inputs.append(mask_zero(src_mask))

    names = ["we1", "be1", "wx1", "bx1"]
    if has_enc:
        names += ["we2", "be2", "wx2", "bx2"]
    names += ["w1", "b1", "w2", "b2"]
    inputs += [params[n].astype(jnp.float32) for n in names]

    # Whole problem (~8 KiB) fits trivially in VMEM -> single invocation, no
    # grid, full-array blocks, one lane-contiguous (S, D) output slab.
    # TODO(synk): for large L/D add a row-split grid axis with
    # dimension_semantics=("parallel",) so v7x's 2 TensorCores both work, and
    # re-derive tiling against v7x's 64 MiB VMEM (bf16 MXU inputs on v6e/v7x).
    out = pl.pallas_call(
        _make_kernel(has_enc, has_trg, has_src, BH, L, D),
        out_shape=jax.ShapeDtypeStruct((S, D), jnp.float32),
    )(*inputs)
    return out.reshape(2, B, H, L, D)


# ---------------------------- pure-JAX reference ----------------------------
def decoder_layer_ref(dec, enc, trg_mask, src_mask, params):
    def ln(t):
        mean = jnp.mean(t, axis=-1, keepdims=True)
        var = jnp.mean((t - mean) ** 2, axis=-1, keepdims=True)
        return (t - mean) / jnp.sqrt(var + EPS)

    def mha(p_pair, we, be, wx, bx, mask):
        g = p_pair[1]
        e = jnp.dot(g, we) + be
        xt = jnp.dot(p_pair[0], wx) + bx
        score = jnp.einsum("bhld,bhmd->bhlm", g, e) / SCORE_DENOM
        if mask is not None:
            score = jnp.where(mask == 0, NEG_FILL, score)
        score = jax.nn.softmax(score, axis=-1)
        return jnp.einsum("bhlm,bhmd->bhld", score, xt)

    a1 = mha(dec, params["we1"], params["be1"], params["wx1"], params["bx1"], trg_mask)
    p = ln(a1 + dec)
    if enc is not None:
        a2 = mha(p, params["we2"], params["be2"], params["wx2"], params["bx2"], src_mask)
        p = ln(a2 + p)
    h = jnp.maximum(jnp.dot(p, params["w1"]) + params["b1"], 0.0)
    f = jnp.dot(h, params["w2"]) + params["b2"]
    return ln(f + p)


def _init_linear(key, fan_in, fan_out):
    # matches torch.nn.Linear default: U(-1/sqrt(fan_in), 1/sqrt(fan_in))
    k = 1.0 / math.sqrt(fan_in)
    kw, kb = jax.random.split(key)
    w = jax.random.uniform(kw, (fan_in, fan_out), jnp.float32, -k, k)
    b = jax.random.uniform(kb, (1, fan_out), jnp.float32, -k, k)
    return w, b


if __name__ == "__main__":
    d_model, ffn_hidden, n_head = 32, 64, 2
    B, H, L = 2, n_head, 8

    root = jax.random.PRNGKey(0)
    keys = jax.random.split(root, 8)

    dec = jax.random.normal(keys[0], (2, B, H, L, d_model), jnp.float32)
    enc = jnp.ones((B, L, d_model), jnp.float32)  # only `enc is not None` matters
    # all-zero masks -> masked_fill replaces every score with -10000 (finite demo)
    trg_mask = jnp.zeros((B, H, L, L), jnp.float32)
    src_mask = jnp.zeros((B, H, L, L), jnp.float32)

    params = {}
    params["we1"], params["be1"] = _init_linear(keys[1], d_model, d_model)
    params["wx1"], params["bx1"] = _init_linear(keys[2], d_model, d_model)
    params["we2"], params["be2"] = _init_linear(keys[3], d_model, d_model)
    params["wx2"], params["bx2"] = _init_linear(keys[4], d_model, d_model)
    params["w1"], params["b1"] = _init_linear(keys[5], d_model, ffn_hidden)
    params["w2"], params["b2"] = _init_linear(keys[6], ffn_hidden, d_model)

    out = decoder_layer_pallas(dec, enc, trg_mask, src_mask, params)
    out = jax.block_until_ready(out)

    ref = decoder_layer_ref(dec, enc, trg_mask, src_mask, params)
    assert out.shape == (2, B, H, L, d_model), out.shape
    assert bool(jnp.allclose(out, ref, rtol=1e-2, atol=1e-2, equal_nan=True)), (
        float(jnp.max(jnp.abs(out - ref)))
    )
    print("KERNEL_OK")
</pallas_src>

<mosaic_0001>
module attributes {stable_mosaic.version = 11 : i64} {
  func.func @kernel(%arg0: memref<2x4x8x32xf32, #tpu.memory_space<vmem>>, %arg1: memref<4x8x8xi32, #tpu.memory_space<vmem>>, %arg2: memref<4x8x8xi32, #tpu.memory_space<vmem>>, %arg3: memref<32x32xf32, #tpu.memory_space<vmem>>, %arg4: memref<1x32xf32, #tpu.memory_space<vmem>>, %arg5: memref<32x32xf32, #tpu.memory_space<vmem>>, %arg6: memref<1x32xf32, #tpu.memory_space<vmem>>, %arg7: memref<32x32xf32, #tpu.memory_space<vmem>>, %arg8: memref<1x32xf32, #tpu.memory_space<vmem>>, %arg9: memref<32x32xf32, #tpu.memory_space<vmem>>, %arg10: memref<1x32xf32, #tpu.memory_space<vmem>>, %arg11: memref<32x64xf32, #tpu.memory_space<vmem>>, %arg12: memref<1x64xf32, #tpu.memory_space<vmem>>, %arg13: memref<64x32xf32, #tpu.memory_space<vmem>>, %arg14: memref<1x32xf32, #tpu.memory_space<vmem>>, %arg15: memref<64x32xf32, #tpu.memory_space<vmem>>) attributes {dimension_semantics = [], scalar_prefetch = 0 : i64, scratch_operands = 0 : i64, tpu.core_type = #tpu.core_type<tc>} {
    %c0 = arith.constant 0 : index
    %c0_0 = arith.constant 0 : index
    %c0_1 = arith.constant 0 : index
    %c0_2 = arith.constant 0 : index
    %0 = vector.load %arg0[%c0, %c0_0, %c0_1, %c0_2] : memref<2x4x8x32xf32, #tpu.memory_space<vmem>>, vector<2x4x8x32xf32>
    %c0_3 = arith.constant 0 : index
    %c0_4 = arith.constant 0 : index
    %c0_5 = arith.constant 0 : index
    %1 = vector.load %arg1[%c0_3, %c0_4, %c0_5] : memref<4x8x8xi32, #tpu.memory_space<vmem>>, vector<4x8x8xi32>
    %c0_6 = arith.constant 0 : index
    %c0_7 = arith.constant 0 : index
    %c0_8 = arith.constant 0 : index
    %2 = vector.load %arg2[%c0_6, %c0_7, %c0_8] : memref<4x8x8xi32, #tpu.memory_space<vmem>>, vector<4x8x8xi32>
    %3 = vector.extract_strided_slice %0 {offsets = [0, 0, 0, 0], sizes = [1, 4, 8, 32], strides = [1, 1, 1, 1]} : vector<2x4x8x32xf32> to vector<1x4x8x32xf32>
    %4 = vector.shape_cast %3 : vector<1x4x8x32xf32> to vector<4x8x32xf32>
    %5 = vector.extract_strided_slice %0 {offsets = [1, 0, 0, 0], sizes = [1, 4, 8, 32], strides = [1, 1, 1, 1]} : vector<2x4x8x32xf32> to vector<1x4x8x32xf32>
    %6 = vector.shape_cast %5 : vector<1x4x8x32xf32> to vector<4x8x32xf32>
    %7 = vector.shape_cast %6 : vector<4x8x32xf32> to vector<32x32xf32>
    %c0_9 = arith.constant 0 : index
    %c0_10 = arith.constant 0 : index
    %8 = vector.load %arg3[%c0_9, %c0_10] : memref<32x32xf32, #tpu.memory_space<vmem>>, vector<32x32xf32>
    %cst = arith.constant dense<0.000000e+00> : vector<32x32xf32>
    %9 = tpu.matmul %7, %8, %cst {dimension_numbers = #tpu.dot_dimension_numbers<[1], [0], [0], [1], [0, 0, 1, 1], [], []>} : vector<32x32xf32>, vector<32x32xf32>, vector<32x32xf32> -> vector<32x32xf32>
    %c0_11 = arith.constant 0 : index
    %c0_12 = arith.constant 0 : index
    %10 = vector.load %arg4[%c0_11, %c0_12] : memref<1x32xf32, #tpu.memory_space<vmem>>, vector<1x32xf32>
    %11 = vector.broadcast %10 : vector<1x32xf32> to vector<32x32xf32>
    %12 = arith.addf %9, %11 : vector<32x32xf32>
    %13 = vector.shape_cast %12 : vector<32x32xf32> to vector<4x8x32xf32>
    %14 = vector.shape_cast %4 : vector<4x8x32xf32> to vector<32x32xf32>
    %c0_13 = arith.constant 0 : index
    %c0_14 = arith.constant 0 : index
    %15 = vector.load %arg5[%c0_13, %c0_14] : memref<32x32xf32, #tpu.memory_space<vmem>>, vector<32x32xf32>
    %cst_15 = arith.constant dense<0.000000e+00> : vector<32x32xf32>
    %16 = tpu.matmul %14, %15, %cst_15 {dimension_numbers = #tpu.dot_dimension_numbers<[1], [0], [0], [1], [0, 0, 1, 1], [], []>} : vector<32x32xf32>, vector<32x32xf32>, vector<32x32xf32> -> vector<32x32xf32>
    %c0_16 = arith.constant 0 : index
    %c0_17 = arith.constant 0 : index
    %17 = vector.load %arg6[%c0_16, %c0_17] : memref<1x32xf32, #tpu.memory_space<vmem>>, vector<1x32xf32>
    %18 = vector.broadcast %17 : vector<1x32xf32> to vector<32x32xf32>
    %19 = arith.addf %16, %18 : vector<32x32xf32>
    %20 = vector.shape_cast %19 : vector<32x32xf32> to vector<4x8x32xf32>
    "tpu.trace_start"() <{level = 10 : i32, message = "bld,bmd->blm"}> : () -> ()
    %cst_18 = arith.constant dense<0.000000e+00> : vector<4x8x8xf32>
    %21 = tpu.matmul %6, %13, %cst_18 {dimension_numbers = #tpu.dot_dimension_numbers<[2], [2], [1], [1], [0, 0, 0, 1, 1, 1], [0], [0]>} : vector<4x8x32xf32>, vector<4x8x32xf32>, vector<4x8x8xf32> -> vector<4x8x8xf32>
    "tpu.trace_stop"() : () -> ()
    %cst_19 = arith.constant 0.000000e+00 : f32
    %22 = vector.broadcast %cst_19 : f32 to vector<4x8x8xf32>
    %23 = arith.divf %21, %22 : vector<4x8x8xf32>
    %c0_i32 = arith.constant 0 : i32
    %24 = vector.broadcast %c0_i32 : i32 to vector<4x8x8xi32>
    %25 = arith.cmpi ne, %1, %24 : vector<4x8x8xi32>
    %cst_20 = arith.constant -1.000000e+04 : f32
    %26 = vector.broadcast %cst_20 : f32 to vector<4x8x8xf32>
    %27 = arith.select %25, %26, %23 : vector<4x8x8xi1>, vector<4x8x8xf32>
    %cst_21 = arith.constant dense<0xFF800000> : vector<4x8xf32>
    %28 = vector.multi_reduction <maximumf>, %27, %cst_21 [2] : vector<4x8x8xf32> to vector<4x8xf32>
    %29 = vector.shape_cast %28 : vector<4x8xf32> to vector<4x8x1xf32>
    %30 = vector.broadcast %29 : vector<4x8x1xf32> to vector<4x8x8xf32>
    %31 = arith.subf %27, %30 : vector<4x8x8xf32>
    %32 = math.exp %31 : vector<4x8x8xf32>
    %cst_22 = arith.constant dense<0.000000e+00> : vector<4x8xf32>
    %33 = vector.multi_reduction <add>, %32, %cst_22 [2] : vector<4x8x8xf32> to vector<4x8xf32>
    %34 = vector.shape_cast %33 : vector<4x8xf32> to vector<4x8x1xf32>
    %35 = tpu.reciprocal %34 {approx = true} : vector<4x8x1xf32> -> vector<4x8x1xf32>
    %36 = vector.broadcast %35 : vector<4x8x1xf32> to vector<4x8x8xf32>
    %37 = arith.mulf %32, %36 : vector<4x8x8xf32>
    "tpu.trace_start"() <{level = 10 : i32, message = "blm,bmd->bld"}> : () -> ()
    %cst_23 = arith.constant dense<0.000000e+00> : vector<4x8x32xf32>
    %38 = tpu.matmul %37, %20, %cst_23 {dimension_numbers = #tpu.dot_dimension_numbers<[2], [1], [1], [2], [0, 0, 0, 1, 1, 2], [0], [0]>} : vector<4x8x8xf32>, vector<4x8x32xf32>, vector<4x8x32xf32> -> vector<4x8x32xf32>
    "tpu.trace_stop"() : () -> ()
    %39 = vector.shape_cast %38 : vector<4x8x32xf32> to vector<1x4x8x32xf32>
    %40 = vector.broadcast %39 : vector<1x4x8x32xf32> to vector<2x4x8x32xf32>
    %41 = arith.addf %40, %0 : vector<2x4x8x32xf32>
    %42 = vector.shape_cast %41 : vector<2x4x8x32xf32> to vector<64x32xf32>
    %cst_24 = arith.constant dense<0.000000e+00> : vector<64xf32>
    %43 = vector.multi_reduction <add>, %42, %cst_24 [1] : vector<64x32xf32> to vector<64xf32>
    %44 = vector.shape_cast %43 : vector<64xf32> to vector<64x1xf32>
    %cst_25 = arith.constant 3.200000e+01 : f32
    %45 = vector.broadcast %cst_25 : f32 to vector<64x1xf32>
    %46 = arith.divf %44, %45 : vector<64x1xf32>
    %47 = vector.broadcast %46 : vector<64x1xf32> to vector<64x32xf32>
    %48 = arith.subf %42, %47 : vector<64x32xf32>
    %49 = arith.mulf %48, %48 : vector<64x32xf32>
    %cst_26 = arith.constant dense<0.000000e+00> : vector<64xf32>
    %50 = vector.multi_reduction <add>, %49, %cst_26 [1] : vector<64x32xf32> to vector<64xf32>
    %51 = vector.shape_cast %50 : vector<64xf32> to vector<64x1xf32>
    %cst_27 = arith.constant 3.200000e+01 : f32
    %52 = vector.broadcast %cst_27 : f32 to vector<64x1xf32>
    %53 = arith.divf %51, %52 : vector<64x1xf32>
    %54 = vector.broadcast %46 : vector<64x1xf32> to vector<64x32xf32>
    %55 = arith.subf %42, %54 : vector<64x32xf32>
    %cst_28 = arith.constant 9.99999996E-13 : f32
    %56 = vector.broadcast %cst_28 : f32 to vector<64x1xf32>
    %57 = arith.addf %53, %56 : vector<64x1xf32>
    %58 = math.rsqrt %57 : vector<64x1xf32>
    %59 = vector.broadcast %58 : vector<64x1xf32> to vector<64x32xf32>
    %60 = arith.mulf %55, %59 : vector<64x32xf32>
    %61 = vector.shape_cast %60 : vector<64x32xf32> to vector<2x4x8x32xf32>
    %62 = vector.extract_strided_slice %61 {offsets = [0, 0, 0, 0], sizes = [1, 4, 8, 32], strides = [1, 1, 1, 1]} : vector<2x4x8x32xf32> to vector<1x4x8x32xf32>
    %63 = vector.shape_cast %62 : vector<1x4x8x32xf32> to vector<4x8x32xf32>
    %64 = vector.extract_strided_slice %61 {offsets = [1, 0, 0, 0], sizes = [1, 4, 8, 32], strides = [1, 1, 1, 1]} : vector<2x4x8x32xf32> to vector<1x4x8x32xf32>
    %65 = vector.shape_cast %64 : vector<1x4x8x32xf32> to vector<4x8x32xf32>
    %66 = vector.shape_cast %65 : vector<4x8x32xf32> to vector<32x32xf32>
    %c0_29 = arith.constant 0 : index
    %c0_30 = arith.constant 0 : index
    %67 = vector.load %arg7[%c0_29, %c0_30] : memref<32x32xf32, #tpu.memory_space<vmem>>, vector<32x32xf32>
    %cst_31 = arith.constant dense<0.000000e+00> : vector<32x32xf32>
    %68 = tpu.matmul %66, %67, %cst_31 {dimension_numbers = #tpu.dot_dimension_numbers<[1], [0], [0], [1], [0, 0, 1, 1], [], []>} : vector<32x32xf32>, vector<32x32xf32>, vector<32x32xf32> -> vector<32x32xf32>
    %c0_32 = arith.constant 0 : index
    %c0_33 = arith.constant 0 : index
    %69 = vector.load %arg8[%c0_32, %c0_33] : memref<1x32xf32, #tpu.memory_space<vmem>>, vector<1x32xf32>
    %70 = vector.broadcast %69 : vector<1x32xf32> to vector<32x32xf32>
    %71 = arith.addf %68, %70 : vector<32x32xf32>
    %72 = vector.shape_cast %71 : vector<32x32xf32> to vector<4x8x32xf32>
    %73 = vector.shape_cast %63 : vector<4x8x32xf32> to vector<32x32xf32>
    %c0_34 = arith.constant 0 : index
    %c0_35 = arith.constant 0 : index
    %74 = vector.load %arg9[%c0_34, %c0_35] : memref<32x32xf32, #tpu.memory_space<vmem>>, vector<32x32xf32>
    %cst_36 = arith.constant dense<0.000000e+00> : vector<32x32xf32>
    %75 = tpu.matmul %73, %74, %cst_36 {dimension_numbers = #tpu.dot_dimension_numbers<[1], [0], [0], [1], [0, 0, 1, 1], [], []>} : vector<32x32xf32>, vector<32x32xf32>, vector<32x32xf32> -> vector<32x32xf32>
    %c0_37 = arith.constant 0 : index
    %c0_38 = arith.constant 0 : index
    %76 = vector.load %arg10[%c0_37, %c0_38] : memref<1x32xf32, #tpu.memory_space<vmem>>, vector<1x32xf32>
    %77 = vector.broadcast %76 : vector<1x32xf32> to vector<32x32xf32>
    %78 = arith.addf %75, %77 : vector<32x32xf32>
    %79 = vector.shape_cast %78 : vector<32x32xf32> to vector<4x8x32xf32>
    "tpu.trace_start"() <{level = 10 : i32, message = "bld,bmd->blm"}> : () -> ()
    %cst_39 = arith.constant dense<0.000000e+00> : vector<4x8x8xf32>
    %80 = tpu.matmul %65, %72, %cst_39 {dimension_numbers = #tpu.dot_dimension_numbers<[2], [2], [1], [1], [0, 0, 0, 1, 1, 1], [0], [0]>} : vector<4x8x32xf32>, vector<4x8x32xf32>, vector<4x8x8xf32> -> vector<4x8x8xf32>
    "tpu.trace_stop"() : () -> ()
    %cst_40 = arith.constant 0.000000e+00 : f32
    %81 = vector.broadcast %cst_40 : f32 to vector<4x8x8xf32>
    %82 = arith.divf %80, %81 : vector<4x8x8xf32>
    %c0_i32_41 = arith.constant 0 : i32
    %83 = vector.broadcast %c0_i32_41 : i32 to vector<4x8x8xi32>
    %84 = arith.cmpi ne, %2, %83 : vector<4x8x8xi32>
    %cst_42 = arith.constant -1.000000e+04 : f32
    %85 = vector.broadcast %cst_42 : f32 to vector<4x8x8xf32>
    %86 = arith.select %84, %85, %82 : vector<4x8x8xi1>, vector<4x8x8xf32>
    %cst_43 = arith.constant dense<0xFF800000> : vector<4x8xf32>
    %87 = vector.multi_reduction <maximumf>, %86, %cst_43 [2] : vector<4x8x8xf32> to vector<4x8xf32>
    %88 = vector.shape_cast %87 : vector<4x8xf32> to vector<4x8x1xf32>
    %89 = vector.broadcast %88 : vector<4x8x1xf32> to vector<4x8x8xf32>
    %90 = arith.subf %86, %89 : vector<4x8x8xf32>
    %91 = math.exp %90 : vector<4x8x8xf32>
    %cst_44 = arith.constant dense<0.000000e+00> : vector<4x8xf32>
    %92 = vector.multi_reduction <add>, %91, %cst_44 [2] : vector<4x8x8xf32> to vector<4x8xf32>
    %93 = vector.shape_cast %92 : vector<4x8xf32> to vector<4x8x1xf32>
    %94 = tpu.reciprocal %93 {approx = true} : vector<4x8x1xf32> -> vector<4x8x1xf32>
    %95 = vector.broadcast %94 : vector<4x8x1xf32> to vector<4x8x8xf32>
    %96 = arith.mulf %91, %95 : vector<4x8x8xf32>
    "tpu.trace_start"() <{level = 10 : i32, message = "blm,bmd->bld"}> : () -> ()
    %cst_45 = arith.constant dense<0.000000e+00> : vector<4x8x32xf32>
    %97 = tpu.matmul %96, %79, %cst_45 {dimension_numbers = #tpu.dot_dimension_numbers<[2], [1], [1], [2], [0, 0, 0, 1, 1, 2], [0], [0]>} : vector<4x8x8xf32>, vector<4x8x32xf32>, vector<4x8x32xf32> -> vector<4x8x32xf32>
    "tpu.trace_stop"() : () -> ()
    %98 = vector.shape_cast %97 : vector<4x8x32xf32> to vector<1x4x8x32xf32>
    %99 = vector.broadcast %98 : vector<1x4x8x32xf32> to vector<2x4x8x32xf32>
    %100 = arith.addf %99, %61 : vector<2x4x8x32xf32>
    %101 = vector.shape_cast %100 : vector<2x4x8x32xf32> to vector<64x32xf32>
    %cst_46 = arith.constant dense<0.000000e+00> : vector<64xf32>
    %102 = vector.multi_reduction <add>, %101, %cst_46 [1] : vector<64x32xf32> to vector<64xf32>
    %103 = vector.shape_cast %102 : vector<64xf32> to vector<64x1xf32>
    %cst_47 = arith.constant 3.200000e+01 : f32
    %104 = vector.broadcast %cst_47 : f32 to vector<64x1xf32>
    %105 = arith.divf %103, %104 : vector<64x1xf32>
    %106 = vector.broadcast %105 : vector<64x1xf32> to vector<64x32xf32>
    %107 = arith.subf %101, %106 : vector<64x32xf32>
    %108 = arith.mulf %107, %107 : vector<64x32xf32>
    %cst_48 = arith.constant dense<0.000000e+00> : vector<64xf32>
    %109 = vector.multi_reduction <add>, %108, %cst_48 [1] : vector<64x32xf32> to vector<64xf32>
    %110 = vector.shape_cast %109 : vector<64xf32> to vector<64x1xf32>
    %cst_49 = arith.constant 3.200000e+01 : f32
    %111 = vector.broadcast %cst_49 : f32 to vector<64x1xf32>
    %112 = arith.divf %110, %111 : vector<64x1xf32>
    %113 = vector.broadcast %105 : vector<64x1xf32> to vector<64x32xf32>
    %114 = arith.subf %101, %113 : vector<64x32xf32>
    %cst_50 = arith.constant 9.99999996E-13 : f32
    %115 = vector.broadcast %cst_50 : f32 to vector<64x1xf32>
    %116 = arith.addf %112, %115 : vector<64x1xf32>
    %117 = math.rsqrt %116 : vector<64x1xf32>
    %118 = vector.broadcast %117 : vector<64x1xf32> to vector<64x32xf32>
    %119 = arith.mulf %114, %118 : vector<64x32xf32>
    %c0_51 = arith.constant 0 : index
    %c0_52 = arith.constant 0 : index
    %120 = vector.load %arg11[%c0_51, %c0_52] : memref<32x64xf32, #tpu.memory_space<vmem>>, vector<32x64xf32>
    %cst_53 = arith.constant dense<0.000000e+00> : vector<64x64xf32>
    %121 = tpu.matmul %119, %120, %cst_53 {dimension_numbers = #tpu.dot_dimension_numbers<[1], [0], [0], [1], [0, 0, 1, 1], [], []>} : vector<64x32xf32>, vector<32x64xf32>, vector<64x64xf32> -> vector<64x64xf32>
    %c0_54 = arith.constant 0 : index
    %c0_55 = arith.constant 0 : index
    %122 = vector.load %arg12[%c0_54, %c0_55] : memref<1x64xf32, #tpu.memory_space<vmem>>, vector<1x64xf32>
    %123 = vector.broadcast %122 : vector<1x64xf32> to vector<64x64xf32>
    %124 = arith.addf %121, %123 : vector<64x64xf32>
    %cst_56 = arith.constant 0.000000e+00 : f32
    %125 = vector.broadcast %cst_56 : f32 to vector<64x64xf32>
    %126 = arith.maximumf %124, %125 : vector<64x64xf32>
    %c0_57 = arith.constant 0 : index
    %c0_58 = arith.constant 0 : index
    %127 = vector.load %arg13[%c0_57, %c0_58] : memref<64x32xf32, #tpu.memory_space<vmem>>, vector<64x32xf32>
    %cst_59 = arith.constant dense<0.000000e+00> : vector<64x32xf32>
    %128 = tpu.matmul %126, %127, %cst_59 {dimension_numbers = #tpu.dot_dimension_numbers<[1], [0], [0], [1], [0, 0, 1, 1], [], []>} : vector<64x64xf32>, vector<64x32xf32>, vector<64x32xf32> -> vector<64x32xf32>
    %c0_60 = arith.constant 0 : index
    %c0_61 = arith.constant 0 : index
    %129 = vector.load %arg14[%c0_60, %c0_61] : memref<1x32xf32, #tpu.memory_space<vmem>>, vector<1x32xf32>
    %130 = vector.broadcast %129 : vector<1x32xf32> to vector<64x32xf32>
    %131 = arith.addf %128, %130 : vector<64x32xf32>
    %132 = arith.addf %131, %119 : vector<64x32xf32>
    %cst_62 = arith.constant dense<0.000000e+00> : vector<64xf32>
    %133 = vector.multi_reduction <add>, %132, %cst_62 [1] : vector<64x32xf32> to vector<64xf32>
    %134 = vector.shape_cast %133 : vector<64xf32> to vector<64x1xf32>
    %cst_63 = arith.constant 3.200000e+01 : f32
    %135 = vector.broadcast %cst_63 : f32 to vector<64x1xf32>
    %136 = arith.divf %134, %135 : vector<64x1xf32>
    %137 = vector.broadcast %136 : vector<64x1xf32> to vector<64x32xf32>
    %138 = arith.subf %132, %137 : vector<64x32xf32>
    %139 = arith.mulf %138, %138 : vector<64x32xf32>
    %cst_64 = arith.constant dense<0.000000e+00> : vector<64xf32>
    %140 = vector.multi_reduction <add>, %139, %cst_64 [1] : vector<64x32xf32> to vector<64xf32>
    %141 = vector.shape_cast %140 : vector<64xf32> to vector<64x1xf32>
    %cst_65 = arith.constant 3.200000e+01 : f32
    %142 = vector.broadcast %cst_65 : f32 to vector<64x1xf32>
    %143 = arith.divf %141, %142 : vector<64x1xf32>
    %144 = vector.broadcast %136 : vector<64x1xf32> to vector<64x32xf32>
    %145 = arith.subf %132, %144 : vector<64x32xf32>
    %cst_66 = arith.constant 9.99999996E-13 : f32
    %146 = vector.broadcast %cst_66 : f32 to vector<64x1xf32>
    %147 = arith.addf %143, %146 : vector<64x1xf32>
    %148 = math.rsqrt %147 : vector<64x1xf32>
    %149 = vector.broadcast %148 : vector<64x1xf32> to vector<64x32xf32>
    %150 = arith.mulf %145, %149 : vector<64x32xf32>
    %c0_67 = arith.constant 0 : index
    %c0_68 = arith.constant 0 : index
    %151 = vector.load %arg15[%c0_67, %c0_68] : memref<64x32xf32, #tpu.memory_space<vmem>>, vector<64x32xf32>
    tpu.vector_store %arg15[%c0_67, %c0_68], %150 {strides = array<i32>} : memref<64x32xf32, #tpu.memory_space<vmem>>, vector<64x32xf32>,
    return
  }
}

</mosaic_0001>

<llo_original>
// kernel: tpu_custom_call.1
$region0: #{tpu_custom_call.1}
  #allocation0 [shape = 'u32[]', space=smem, size = 0x4, offset = 0x4, fixed_abs, tag = 'smem constant byte address 0x4 - core index']
  #allocation1 [shape = 'u32[144,128]{1,0:T(1,128)}', space=vmem, size = 0x12000, scoped, tag = 'internal scratch']
  %s0 = inlined_call_operand.vmem [shape: f32[2,4,8,32], index: 0, kind: input, shape index: {}]
  %s1 = inlined_call_operand.vmem [shape: s32[4,8,8], index: 1, kind: input, shape index: {}]
  %s2 = inlined_call_operand.hbm [shape: s32[4,8,8], index: 2, kind: input, shape index: {}]
  %s3 = inlined_call_operand.hbm [shape: f32[32,32], index: 3, kind: input, shape index: {}]
  %s4 = inlined_call_operand.vmem [shape: f32[1,32], index: 4, kind: input, shape index: {}]
  %s5 = inlined_call_operand.hbm [shape: f32[32,32], index: 5, kind: input, shape index: {}]
  %s6 = inlined_call_operand.vmem [shape: f32[1,32], index: 6, kind: input, shape index: {}]
  %s7 = inlined_call_operand.hbm [shape: f32[32,32], index: 7, kind: input, shape index: {}]
  %s8 = inlined_call_operand.vmem [shape: f32[1,32], index: 8, kind: input, shape index: {}]
  %s9 = inlined_call_operand.hbm [shape: f32[32,32], index: 9, kind: input, shape index: {}]
  %s10 = inlined_call_operand.vmem [shape: f32[1,32], index: 10, kind: input, shape index: {}]
  %s11 = inlined_call_operand.hbm [shape: f32[32,64], index: 11, kind: input, shape index: {}]
  %s12 = inlined_call_operand.vmem [shape: f32[1,64], index: 12, kind: input, shape index: {}]
  %s13 = inlined_call_operand.vmem [shape: f32[64,32], index: 13, kind: input, shape index: {}]
  %s14 = inlined_call_operand.vmem [shape: f32[1,32], index: 14, kind: input, shape index: {}]
  %s15 = inlined_call_operand.vmem [shape: f32[64,32], index: 15, kind: output, shape index: {}]
  %s16 = sld [smem:[#allocation0]]
  $region94: #{tpu_custom_call.1} parent=0
    _
  %s18 = ssub.s32 1, %s16
  %s19 = scalar_select 0, %s18, %s16
  $region1: #{tpu_custom_call.1} parent=0
    #allocation2 [shape = 'u8[16384]{0}', space=vmem, size = 0x4000, scoped, tag = 'input window, operand 2, single buffered']
    #allocation3 [shape = 's32[1]{0}', space=sflag, size = 0x4, scoped, tag = 'scoped memory for tpu_custom_call.1']
    #allocation4 [shape = 'u8[16384]{0}', space=vmem, size = 0x4000, scoped, tag = 'input window, operand 3, single buffered']
    #allocation5 [shape = 's32[1]{0}', space=sflag, size = 0x4, scoped, tag = 'scoped memory for tpu_custom_call.1']
    #allocation6 [shape = 'u8[16384]{0}', space=vmem, size = 0x4000, scoped, tag = 'input window, operand 5, single buffered']
    #allocation7 [shape = 'u8[16384]{0}', space=vmem, size = 0x4000, scoped, tag = 'input window, operand 7, single buffered']
    #allocation8 [shape = 's32[1]{0}', space=sflag, size = 0x4, scoped, tag = 'scoped memory for tpu_custom_call.1']
    #allocation9 [shape = 'u8[16384]{0}', space=vmem, size = 0x4000, scoped, tag = 'input window, operand 9, single buffered']
    #allocation10 [shape = 'u8[16384]{0}', space=vmem, size = 0x4000, scoped, tag = 'input window, operand 11, single buffered']
    #allocation11 [shape = 's32[1]{0}', space=sflag, size = 0x4, scoped, tag = 'scoped memory for tpu_custom_call.1']
    %20 = vsyncpa [#allocation3], 0
    %21 = vsyncpa [#allocation5], 0
    %22 = vsyncpa [#allocation8], 0
    %23 = vsyncpa [#allocation11], 0
    // Predicated region
    $region2: #{tpu_custom_call.1} parent=1 // pred_check
      _
    $region3: #{tpu_custom_call.1} parent=1 // pred_check_branch
      %25 = sbr.rel (0) target = $region5
    $region4: #{tpu_custom_call.1} parent=1 // pred_region
      _
    $region5: #{tpu_custom_call.1} parent=1 // pred_fallthru
      _
    // Predicated region
    $region6: #{tpu_custom_call.1} parent=1 // pred_check
      _
    $region7: #{tpu_custom_call.1} parent=1 // pred_check_branch
      %27 = sbr.rel (0) target = $region9
    $region8: #{tpu_custom_call.1} parent=1 // pred_region
      _
    $region9: #{tpu_custom_call.1} parent=1 // pred_fallthru
      _
    // Predicated region
    $region10: #{tpu_custom_call.1} parent=1 // pred_check
      _
    $region11: #{tpu_custom_call.1} parent=1 // pred_check_branch
      %29 = sbr.rel (0) target = $region13
    $region12: #{tpu_custom_call.1} parent=1 // pred_region
      %s31 = ssub.s32 512, 512
      %32 = vsyncadd [#allocation3], %s31
      %s33 = sshll.u32 [#allocation2], 4
      %s34 = int_to_ptr.vmem [resolvable:$true] %s33
      %39 = dma.hbm_to_vmem [thread:$0]  %s2, 512, %s34, [#allocation3], 128, 128, 8
    $region13: #{tpu_custom_call.1} parent=1 // pred_fallthru
      _
    // Predicated region
    $region14: #{tpu_custom_call.1} parent=1 // pred_check
      _
    $region15: #{tpu_custom_call.1} parent=1 // pred_check_branch
      %41 = sbr.rel (0) target = $region17
    $region16: #{tpu_custom_call.1} parent=1 // pred_region
      %s43 = ssub.s32 512, 512
      %44 = vsyncadd [#allocation5], %s43
      %s45 = sshll.u32 [#allocation4], 4
      %s46 = int_to_ptr.vmem [resolvable:$true] %s45
      %51 = dma.hbm_to_vmem [thread:$0]  %s3, 512, %s46, [#allocation5], 128, 128, 8
    $region17: #{tpu_custom_call.1} parent=1 // pred_fallthru
      _
    // Predicated region
    $region18: #{tpu_custom_call.1} parent=1 // pred_check
      _
    $region19: #{tpu_custom_call.1} parent=1 // pred_check_branch
      %53 = sbr.rel (0) target = $region21
    $region20: #{tpu_custom_call.1} parent=1 // pred_region
      _
    $region21: #{tpu_custom_call.1} parent=1 // pred_fallthru
      _
    // Predicated region
    $region22: #{tpu_custom_call.1} parent=1 // pred_check
      _
    $region23: #{tpu_custom_call.1} parent=1 // pred_check_branch
      %55 = sbr.rel (0) target = $region25
    $region24: #{tpu_custom_call.1} parent=1 // pred_region
      %s57 = ssub.s32 512, 512
      %58 = vsyncadd [#allocation5], %s57
      %s59 = sshll.u32 [#allocation6], 4
      %s60 = int_to_ptr.vmem [resolvable:$true] %s59
      %65 = dma.hbm_to_vmem [thread:$0]  %s5, 512, %s60, [#allocation5], 128, 128, 8
    $region25: #{tpu_custom_call.1} parent=1 // pred_fallthru
      _
    // Predicated region
    $region26: #{tpu_custom_call.1} parent=1 // pred_check
      _
    $region27: #{tpu_custom_call.1} parent=1 // pred_check_branch
      %67 = sbr.rel (0) target = $region29
    $region28: #{tpu_custom_call.1} parent=1 // pred_region
      _
    $region29: #{tpu_custom_call.1} parent=1 // pred_fallthru
      _
    // Predicated region
    $region30: #{tpu_custom_call.1} parent=1 // pred_check
      _
    $region31: #{tpu_custom_call.1} parent=1 // pred_check_branch
      %69 = sbr.rel (0) target = $region33
    $region32: #{tpu_custom_call.1} parent=1 // pred_region
      %s71 = ssub.s32 512, 512
      %72 = vsyncadd [#allocation8], %s71
      %s73 = sshll.u32 [#allocation7], 4
      %s74 = int_to_ptr.vmem [resolvable:$true] %s73
      %79 = dma.hbm_to_vmem [thread:$0]  %s7, 512, %s74, [#allocation8], 128, 128, 8
    $region33: #{tpu_custom_call.1} parent=1 // pred_fallthru
      _
    // Predicated region
    $region34: #{tpu_custom_call.1} parent=1 // pred_check
      _
    $region35: #{tpu_custom_call.1} parent=1 // pred_check_branch
      %81 = sbr.rel (0) target = $region37
    $region36: #{tpu_custom_call.1} parent=1 // pred_region
      _
    $region37: #{tpu_custom_call.1} parent=1 // pred_fallthru
      _
    // Predicated region
    $region38: #{tpu_custom_call.1} parent=1 // pred_check
      _
    $region39: #{tpu_custom_call.1} parent=1 // pred_check_branch
      %83 = sbr.rel (0) target = $region41
    $region40: #{tpu_custom_call.1} parent=1 // pred_region
      %s85 = ssub.s32 512, 512
      %86 = vsyncadd [#allocation8], %s85
      %s87 = sshll.u32 [#allocation9], 4
      %s88 = int_to_ptr.vmem [resolvable:$true] %s87
      %93 = dma.hbm_to_vmem [thread:$0]  %s9, 512, %s88, [#allocation8], 128, 128, 8
    $region41: #{tpu_custom_call.1} parent=1 // pred_fallthru
      _
    // Predicated region
    $region42: #{tpu_custom_call.1} parent=1 // pred_check
      _
    $region43: #{tpu_custom_call.1} parent=1 // pred_check_branch
      %95 = sbr.rel (0) target = $region45
    $region44: #{tpu_custom_call.1} parent=1 // pred_region
      _
    $region45: #{tpu_custom_call.1} parent=1 // pred_fallthru
      _
    // Predicated region
    $region46: #{tpu_custom_call.1} parent=1 // pred_check
      _
    $region47: #{tpu_custom_call.1} parent=1 // pred_check_branch
      %97 = sbr.rel (0) target = $region49
    $region48: #{tpu_custom_call.1} parent=1 // pred_region
      %s99 = ssub.s32 512, 512
      %100 = vsyncadd [#allocation11], %s99
      %s101 = sshll.u32 [#allocation10], 4
      %s102 = int_to_ptr.vmem [resolvable:$true] %s101
      %107 = dma.hbm_to_vmem [thread:$0]  %s11, 512, %s102, [#allocation11], 128, 128, 8
    $region49: #{tpu_custom_call.1} parent=1 // pred_fallthru
      _
    // Predicated region
    $region50: #{tpu_custom_call.1} parent=1 // pred_check
      _
    $region51: #{tpu_custom_call.1} parent=1 // pred_check_branch
      %109 = sbr.rel (0) target = $region53
    $region52: #{tpu_custom_call.1} parent=1 // pred_region
      _
    $region53: #{tpu_custom_call.1} parent=1 // pred_fallthru
      _
    // Predicated region
    $region54: #{tpu_custom_call.1} parent=1 // pred_check
      _
    $region55: #{tpu_custom_call.1} parent=1 // pred_check_branch
      %111 = sbr.rel (0) target = $region57
    $region56: #{tpu_custom_call.1} parent=1 // pred_region
      _
    $region57: #{tpu_custom_call.1} parent=1 // pred_fallthru
      _
    // Predicated region
    $region58: #{tpu_custom_call.1} parent=1 // pred_check
      _
    $region59: #{tpu_custom_call.1} parent=1 // pred_check_branch
      %113 = sbr.rel (0) target = $region61
    $region60: #{tpu_custom_call.1} parent=1 // pred_region
      _
    $region61: #{tpu_custom_call.1} parent=1 // pred_fallthru
      _
    // Predicated region
    $region62: #{tpu_custom_call.1} parent=1 // pred_check
      _
    $region63: #{tpu_custom_call.1} parent=1 // pred_check_branch
      %115 = sbr.rel (0) target = $region65
    $region64: #{tpu_custom_call.1} parent=1 // pred_region
      %116 = dma.done [#allocation3], 512
    $region65: #{tpu_custom_call.1} parent=1 // pred_fallthru
      _
    // Predicated region
    $region66: #{tpu_custom_call.1} parent=1 // pred_check
      _
    $region67: #{tpu_custom_call.1} parent=1 // pred_check_branch
      %118 = sbr.rel (0) target = $region69
    $region68: #{tpu_custom_call.1} parent=1 // pred_region
      %119 = dma.done [#allocation5], 512
    $region69: #{tpu_custom_call.1} parent=1 // pred_fallthru
      _
    // Predicated region
    $region70: #{tpu_custom_call.1} parent=1 // pred_check
      _
    $region71: #{tpu_custom_call.1} parent=1 // pred_check_branch
      %121 = sbr.rel (0) target = $region73
    $region72: #{tpu_custom_call.1} parent=1 // pred_region
      %122 = dma.done [#allocation5], 512
    $region73: #{tpu_custom_call.1} parent=1 // pred_fallthru
      _
    // Predicated region
    $region74: #{tpu_custom_call.1} parent=1 // pred_check
      _
    $region75: #{tpu_custom_call.1} parent=1 // pred_check_branch
      %124 = sbr.rel (0) target = $region77
    $region76: #{tpu_custom_call.1} parent=1 // pred_region
      %125 = dma.done [#allocation8], 512
    $region77: #{tpu_custom_call.1} parent=1 // pred_fallthru
      _
    // Predicated region
    $region78: #{tpu_custom_call.1} parent=1 // pred_check
      _
    $region79: #{tpu_custom_call.1} parent=1 // pred_check_branch
      %127 = sbr.rel (0) target = $region81
    $region80: #{tpu_custom_call.1} parent=1 // pred_region
      %128 = dma.done [#allocation8], 512
    $region81: #{tpu_custom_call.1} parent=1 // pred_fallthru
      _
    // Predicated region
    $region82: #{tpu_custom_call.1} parent=1 // pred_check
      _
    $region83: #{tpu_custom_call.1} parent=1 // pred_check_branch
      %130 = sbr.rel (0) target = $region85
    $region84: #{tpu_custom_call.1} parent=1 // pred_region
      %131 = dma.done [#allocation11], 512
    $region85: #{tpu_custom_call.1} parent=1 // pred_fallthru
      _
    %v132 = vld [vmem:[%s0] sm:$0xff]
    %v133 = vld [vmem:[%s0 + $0x8] sm:$0xff]
    %v134 = vld [vmem:[%s0 + $0x10] sm:$0xff]
    %v135 = vld [vmem:[%s0 + $0x18] sm:$0xff]
    %v136 = vld [vmem:[%s0 + $0x20] sm:$0xff]
    %v137 = vld [vmem:[%s0 + $0x28] sm:$0xff]
    %v138 = vld [vmem:[%s0 + $0x30] sm:$0xff]
    %v139 = vld [vmem:[%s0 + $0x38] sm:$0xff]
    %v140 = vld [vmem:[%s1] sm:$0xff]
    %v141 = vld [vmem:[%s1 + $0x8] sm:$0xff]
    %v142 = vld [vmem:[%s1 + $0x10] sm:$0xff]
    %v143 = vld [vmem:[%s1 + $0x18] sm:$0xff]
    %v144 = vld [vmem:[#allocation2] sm:$0xff]
    %v145 = vld [vmem:[#allocation2 + $0x8] sm:$0xff]
    %v146 = vld [vmem:[#allocation2 + $0x10] sm:$0xff]
    %v147 = vld [vmem:[#allocation2 + $0x18] sm:$0xff]
    %v148 = vld [vmem:[#allocation4] sm:$0xff]
    %v149 = vld [vmem:[#allocation4 + $0x8] sm:$0xff]
    %v150 = vld [vmem:[#allocation4 + $0x10] sm:$0xff]
    %v151 = vld [vmem:[#allocation4 + $0x18] sm:$0xff]
    %v152 = vld [vmem:[%s4] sm:$0x1]
    %v154 = vlaneseq
    %v155 = vshrl.u32 %v154, 7
    %v156 = vsub.s32 0, %v155
    %v157 = vrot.slane %v152, %v156
    %vm159 = vcmask 261120
    %v161 = vsel %vm159, %v136, 0
    %v164 = vsel %vm159, %v137, 0
    %v167 = vsel %vm159, %v138, 0
    %v170 = vsel %vm159, %v139, 0
    %172 = vmatprep.subr.mxu0 0.0
    %173 = vmatpush1.msra.mxu0 %v148
    %174 = vmatprep.subr.mxu0 0.0
    %175 = vmatpush1.msra.mxu0 %v149
    %176 = vmatprep.subr.mxu0 0.0
    %177 = vmatpush1.msra.mxu0 %v150
    %178 = vmatprep.subr.mxu0 0.0
    %179 = vmatpush1.msra.mxu0 %v151
    %180 = vmatprep.subr.mxu0 0.0
    %181 = vmatpush1.msra.mxu0 0.0
    %182 = vmatprep.subr.mxu0 0.0
    %183 = vmatpush1.msra.mxu0 0.0
    %184 = vmatprep.subr.mxu0 0.0
    %185 = vmatpush1.msra.mxu0 0.0
    %186 = vmatprep.subr.mxu0 0.0
    %187 = vmatpush1.msra.mxu0 0.0
    %188 = vmatprep.subr.mxu0 0.0
    %189 = vmatpush1.msra.mxu0 0.0
    %190 = vmatprep.subr.mxu0 0.0
    %191 = vmatpush1.msra.mxu0 0.0
    %192 = vmatprep.subr.mxu0 0.0
    %193 = vmatpush1.msra.mxu0 0.0
    %194 = vmatprep.subr.mxu0 0.0
    %195 = vmatpush1.msra.mxu0 0.0
    %196 = vmatprep.subr.mxu0 0.0
    %197 = vmatpush1.msra.mxu0 0.0
    %198 = vmatprep.subr.mxu0 0.0
    %199 = vmatpush1.msra.mxu0 0.0
    %200 = vmatprep.subr.mxu0 0.0
    %201 = vmatpush1.msra.mxu0 0.0
    %202 = vmatprep.subr.mxu0 0.0
    %203 = vmatpush1.msra.mxu0 0.0
    %204 = vmatprep.subr.mxu0 0.0
    %205 = vmatpush1.msra.mxu0 0.0
    %206 = vmatprep.subr.mxu0 0.0
    %207 = vmatpush1.msra.mxu0 0.0
    %208 = vmatprep.subr.mxu0 0.0
    %209 = vmatpush1.msra.mxu0 0.0
    %210 = vmatprep.subr.mxu0 0.0
    %211 = vmatpush1.msra.mxu0 0.0
    %212 = vmatprep.subr.mxu0 0.0
    %213 = vmatpush1.msra.mxu0 0.0
    %214 = vmatprep.subr.mxu0 0.0
    %215 = vmatpush1.msra.mxu0 0.0
    %216 = vmatprep.subr.mxu0 0.0
    %217 = vmatpush1.msra.mxu0 0.0
    %218 = vmatprep.subr.mxu0 0.0
    %219 = vmatpush1.msra.mxu0 0.0
    %220 = vmatprep.subr.mxu0 0.0
    %221 = vmatpush1.msra.mxu0 0.0
    %222 = vmatprep.subr.mxu0 0.0
    %223 = vmatpush1.msra.mxu0 0.0
    %224 = vmatprep.subr.mxu0 0.0
    %225 = vmatpush1.msra.mxu0 0.0
    %226 = vmatprep.subr.mxu0 0.0
    %227 = vmatpush1.msra.mxu0 0.0
    %228 = vmatprep.subr.mxu0 0.0
    %229 = vmatpush1.msra.mxu0 0.0
    %230 = vmatprep.subr.mxu0 0.0
    %231 = vmatpush1.msra.mxu0 0.0
    %232 = vmatprep.subr.mxu0 0.0
    %233 = vmatpush1.msra.mxu0 0.0
    %234 = vmatprep.subr.mxu0 0.0
    %235 = vmatpush1.msra.mxu0 0.0
    %236 = vmatprep.mubr.f32.mxu0 0.0
    %237 = vmatmul.mubr.f32.gmra.mrb[0].mxu0 %v161
    %v238 = vpop.f32.mrb[0].mxu0
    %v239 = vadd.f32 %v157, %v238
    %v240 = vpop.f32.mrb[0].mxu0
    %241 = vmatprep.mubr.f32.mxu0 0.0
    %242 = vmatmul.mubr.f32.gmra.mrb[0].mxu0 %v164
    %v243 = vpop.f32.mrb[0].mxu0
    %v244 = vadd.f32 %v157, %v243
    %v245 = vpop.f32.mrb[0].mxu0
    %246 = vmatprep.mubr.f32.mxu0 0.0
    %247 = vmatmul.mubr.f32.gmra.mrb[0].mxu0 %v167
    %v248 = vpop.f32.mrb[0].mxu0
    %v249 = vadd.f32 %v157, %v248
    %v250 = vpop.f32.mrb[0].mxu0
    %251 = vmatprep.mubr.f32.mxu0 0.0
    %252 = vmatmul.mubr.f32.gmra.mrb[0].mxu0 %v170
    %v253 = vpop.f32.mrb[0].mxu0
    %v254 = vadd.f32 %v157, %v253
    %v255 = vpop.f32.mrb[0].mxu0
    %256 = vdwg.mxu0
    %v257 = vld [vmem:[#allocation6] sm:$0xff]
    %v258 = vld [vmem:[#allocation6 + $0x8] sm:$0xff]
    %v259 = vld [vmem:[#allocation6 + $0x10] sm:$0xff]
    %v260 = vld [vmem:[#allocation6 + $0x18] sm:$0xff]
    %v261 = vld [vmem:[%s6] sm:$0x1]
    %v263 = vlaneseq
    %v264 = vshrl.u32 %v263, 7
    %v265 = vsub.s32 0, %v264
    %v266 = vrot.slane %v261, %v265
    %v269 = vsel %vm159, %v132, 0
    %v272 = vsel %vm159, %v133, 0
    %v275 = vsel %vm159, %v134, 0
    %v278 = vsel %vm159, %v135, 0
    %280 = vmatprep.subr.mxu0 0.0
    %281 = vmatpush1.msra.mxu0 %v257
    %282 = vmatprep.subr.mxu0 0.0
    %283 = vmatpush1.msra.mxu0 %v258
    %284 = vmatprep.subr.mxu0 0.0
    %285 = vmatpush1.msra.mxu0 %v259
    %286 = vmatprep.subr.mxu0 0.0
    %287 = vmatpush1.msra.mxu0 %v260
    %288 = vmatprep.subr.mxu0 0.0
    %289 = vmatpush1.msra.mxu0 0.0
    %290 = vmatprep.subr.mxu0 0.0
    %291 = vmatpush1.msra.mxu0 0.0
    %292 = vmatprep.subr.mxu0 0.0
    %293 = vmatpush1.msra.mxu0 0.0
    %294 = vmatprep.subr.mxu0 0.0
    %295 = vmatpush1.msra.mxu0 0.0
    %296 = vmatprep.subr.mxu0 0.0
    %297 = vmatpush1.msra.mxu0 0.0
    %298 = vmatprep.subr.mxu0 0.0
    %299 = vmatpush1.msra.mxu0 0.0
    %300 = vmatprep.subr.mxu0 0.0
    %301 = vmatpush1.msra.mxu0 0.0
    %302 = vmatprep.subr.mxu0 0.0
    %303 = vmatpush1.msra.mxu0 0.0
    %304 = vmatprep.subr.mxu0 0.0
    %305 = vmatpush1.msra.mxu0 0.0
    %306 = vmatprep.subr.mxu0 0.0
    %307 = vmatpush1.msra.mxu0 0.0
    %308 = vmatprep.subr.mxu0 0.0
    %309 = vmatpush1.msra.mxu0 0.0
    %310 = vmatprep.subr.mxu0 0.0
    %311 = vmatpush1.msra.mxu0 0.0
    %312 = vmatprep.subr.mxu0 0.0
    %313 = vmatpush1.msra.mxu0 0.0
    %314 = vmatprep.subr.mxu0 0.0
    %315 = vmatpush1.msra.mxu0 0.0
    %316 = vmatprep.subr.mxu0 0.0
    %317 = vmatpush1.msra.mxu0 0.0
    %318 = vmatprep.subr.mxu0 0.0
    %319 = vmatpush1.msra.mxu0 0.0
    %320 = vmatprep.subr.mxu0 0.0
    %321 = vmatpush1.msra.mxu0 0.0
    %322 = vmatprep.subr.mxu0 0.0
    %323 = vmatpush1.msra.mxu0 0.0
    %324 = vmatprep.subr.mxu0 0.0
    %325 = vmatpush1.msra.mxu0 0.0
    %326 = vmatprep.subr.mxu0 0.0
    %327 = vmatpush1.msra.mxu0 0.0
    %328 = vmatprep.subr.mxu0 0.0
    %329 = vmatpush1.msra.mxu0 0.0
    %330 = vmatprep.subr.mxu0 0.0
    %331 = vmatpush1.msra.mxu0 0.0
    %332 = vmatprep.subr.mxu0 0.0
    %333 = vmatpush1.msra.mxu0 0.0
    %334 = vmatprep.subr.mxu0 0.0
    %335 = vmatpush1.msra.mxu0 0.0
    %336 = vmatprep.subr.mxu0 0.0
    %337 = vmatpush1.msra.mxu0 0.0
    %338 = vmatprep.subr.mxu0 0.0
    %339 = vmatpush1.msra.mxu0 0.0
    %340 = vmatprep.subr.mxu0 0.0
    %341 = vmatpush1.msra.mxu0 0.0
    %342 = vmatprep.subr.mxu0 0.0
    %343 = vmatpush1.msra.mxu0 0.0
    %344 = vmatprep.mubr.f32.mxu0 0.0
    %345 = vmatmul.mubr.f32.gmra.mrb[0].mxu0 %v269
    %v346 = vpop.f32.mrb[0].mxu0
    %v347 = vadd.f32 %v266, %v346
    %v348 = vpop.f32.mrb[0].mxu0
    %349 = vmatprep.mubr.f32.mxu0 0.0
    %350 = vmatmul.mubr.f32.gmra.mrb[0].mxu0 %v272
    %v351 = vpop.f32.mrb[0].mxu0
    %v352 = vadd.f32 %v266, %v351
    %v353 = vpop.f32.mrb[0].mxu0
    %354 = vmatprep.mubr.f32.mxu0 0.0
    %355 = vmatmul.mubr.f32.gmra.mrb[0].mxu0 %v275
    %v356 = vpop.f32.mrb[0].mxu0
    %v357 = vadd.f32 %v266, %v356
    %v358 = vpop.f32.mrb[0].mxu0
    %359 = vmatprep.mubr.f32.mxu0 0.0
    %360 = vmatmul.mubr.f32.gmra.mrb[0].mxu0 %v278
    %v361 = vpop.f32.mrb[0].mxu0
    %v362 = vadd.f32 %v266, %v361
    %v363 = vpop.f32.mrb[0].mxu0
    %364 = vdwg.mxu0
    %v366 = vsel %vm159, %v239, 0
    %368 = vmatprep.subr.mxu0 0.0
    %369 = vmatpush1.xpose.msra.mxu0 %v366
    %370 = vmatprep.subr.mxu0 0.0
    %371 = vmatpush1.xpose.msra.mxu0 0.0
    %372 = vmatprep.subr.mxu0 0.0
    %373 = vmatpush1.xpose.msra.mxu0 0.0
    %374 = vmatprep.subr.mxu0 0.0
    %375 = vmatpush1.xpose.msra.mxu0 0.0
    %376 = vmatprep.subr.mxu0 0.0
    %377 = vmatpush1.xpose.msra.mxu0 0.0
    %378 = vmatprep.subr.mxu0 0.0
    %379 = vmatpush1.xpose.msra.mxu0 0.0
    %380 = vmatprep.subr.mxu0 0.0
    %381 = vmatpush1.xpose.msra.mxu0 0.0
    %382 = vmatprep.subr.mxu0 0.0
    %383 = vmatpush1.xpose.msra.mxu0 0.0
    %384 = vmatprep.subr.mxu0 0.0
    %385 = vmatpush1.xpose.msra.mxu0 0.0
    %386 = vmatprep.subr.mxu0 0.0
    %387 = vmatpush1.xpose.msra.mxu0 0.0
    %388 = vmatprep.subr.mxu0 0.0
    %389 = vmatpush1.xpose.msra.mxu0 0.0
    %390 = vmatprep.subr.mxu0 0.0
    %391 = vmatpush1.xpose.msra.mxu0 0.0
    %392 = vmatprep.subr.mxu0 0.0
    %393 = vmatpush1.xpose.msra.mxu0 0.0
    %394 = vmatprep.subr.mxu0 0.0
    %395 = vmatpush1.xpose.msra.mxu0 0.0
    %396 = vmatprep.subr.mxu0 0.0
    %397 = vmatpush1.xpose.msra.mxu0 0.0
    %398 = vmatprep.subr.mxu0 0.0
    %399 = vmatpush1.xpose.msra.mxu0 0.0
    %400 = vmatprep.subr.mxu0 0.0
    %401 = vmatpush1.xpose.msra.mxu0 0.0
    %402 = vmatprep.subr.mxu0 0.0
    %403 = vmatpush1.xpose.msra.mxu0 0.0
    %404 = vmatprep.subr.mxu0 0.0
    %405 = vmatpush1.xpose.msra.mxu0 0.0
    %406 = vmatprep.subr.mxu0 0.0
    %407 = vmatpush1.xpose.msra.mxu0 0.0
    %408 = vmatprep.subr.mxu0 0.0
    %409 = vmatpush1.xpose.msra.mxu0 0.0
    %410 = vmatprep.subr.mxu0 0.0
    %411 = vmatpush1.xpose.msra.mxu0 0.0
    %412 = vmatprep.subr.mxu0 0.0
    %413 = vmatpush1.xpose.msra.mxu0 0.0
    %414 = vmatprep.subr.mxu0 0.0
    %415 = vmatpush1.xpose.msra.mxu0 0.0
    %416 = vmatprep.subr.mxu0 0.0
    %417 = vmatpush1.xpose.msra.mxu0 0.0
    %418 = vmatprep.subr.mxu0 0.0
    %419 = vmatpush1.xpose.msra.mxu0 0.0
    %420 = vmatprep.subr.mxu0 0.0
    %421 = vmatpush1.xpose.msra.mxu0 0.0
    %422 = vmatprep.subr.mxu0 0.0
    %423 = vmatpush1.xpose.msra.mxu0 0.0
    %424 = vmatprep.subr.mxu0 0.0
    %425 = vmatpush1.xpose.msra.mxu0 0.0
    %426 = vmatprep.subr.mxu0 0.0
    %427 = vmatpush1.xpose.msra.mxu0 0.0
    %428 = vmatprep.subr.mxu0 0.0
    %429 = vmatpush1.xpose.msra.mxu0 0.0
    %430 = vmatprep.subr.mxu0 0.0
    %431 = vmatpush1.xpose.msra.mxu0 0.0
    %432 = vmatprep.mubr.f32.mxu0 0.0
    %433 = vmatmul.mubr.f32.gmra.mrb[0].mxu0 %v161
    %v434 = vpop.f32.mrb[0].mxu0
    %v435 = vadd.f32 0.0, %v434
    %v436 = vpop.f32.mrb[0].mxu0
    %437 = vdwg.mxu0
    %v439 = vsel %vm159, %v244, 0
    %441 = vmatprep.subr.mxu0 0.0
    %442 = vmatpush1.xpose.msra.mxu0 %v439
    %443 = vmatprep.subr.mxu0 0.0
    %444 = vmatpush1.xpose.msra.mxu0 0.0
    %445 = vmatprep.subr.mxu0 0.0
    %446 = vmatpush1.xpose.msra.mxu0 0.0
    %447 = vmatprep.subr.mxu0 0.0
    %448 = vmatpush1.xpose.msra.mxu0 0.0
    %449 = vmatprep.subr.mxu0 0.0
    %450 = vmatpush1.xpose.msra.mxu0 0.0
    %451 = vmatprep.subr.mxu0 0.0
    %452 = vmatpush1.xpose.msra.mxu0 0.0
    %453 = vmatprep.subr.mxu0 0.0
    %454 = vmatpush1.xpose.msra.mxu0 0.0
    %455 = vmatprep.subr.mxu0 0.0
    %456 = vmatpush1.xpose.msra.mxu0 0.0
    %457 = vmatprep.subr.mxu0 0.0
    %458 = vmatpush1.xpose.msra.mxu0 0.0
    %459 = vmatprep.subr.mxu0 0.0
    %460 = vmatpush1.xpose.msra.mxu0 0.0
    %461 = vmatprep.subr.mxu0 0.0
    %462 = vmatpush1.xpose.msra.mxu0 0.0
    %463 = vmatprep.subr.mxu0 0.0
    %464 = vmatpush1.xpose.msra.mxu0 0.0
    %465 = vmatprep.subr.mxu0 0.0
    %466 = vmatpush1.xpose.msra.mxu0 0.0
    %467 = vmatprep.subr.mxu0 0.0
    %468 = vmatpush1.xpose.msra.mxu0 0.0
    %469 = vmatprep.subr.mxu0 0.0
    %470 = vmatpush1.xpose.msra.mxu0 0.0
    %471 = vmatprep.subr.mxu0 0.0
    %472 = vmatpush1.xpose.msra.mxu0 0.0
    %473 = vmatprep.subr.mxu0 0.0
    %474 = vmatpush1.xpose.msra.mxu0 0.0
    %475 = vmatprep.subr.mxu0 0.0
    %476 = vmatpush1.xpose.msra.mxu0 0.0
    %477 = vmatprep.subr.mxu0 0.0
    %478 = vmatpush1.xpose.msra.mxu0 0.0
    %479 = vmatprep.subr.mxu0 0.0
    %480 = vmatpush1.xpose.msra.mxu0 0.0
    %481 = vmatprep.subr.mxu0 0.0
    %482 = vmatpush1.xpose.msra.mxu0 0.0
    %483 = vmatprep.subr.mxu0 0.0
    %484 = vmatpush1.xpose.msra.mxu0 0.0
    %485 = vmatprep.subr.mxu0 0.0
    %486 = vmatpush1.xpose.msra.mxu0 0.0
    %487 = vmatprep.subr.mxu0 0.0
    %488 = vmatpush1.xpose.msra.mxu0 0.0
    %489 = vmatprep.subr.mxu0 0.0
    %490 = vmatpush1.xpose.msra.mxu0 0.0
    %491 = vmatprep.subr.mxu0 0.0
    %492 = vmatpush1.xpose.msra.mxu0 0.0
    %493 = vmatprep.subr.mxu0 0.0
    %494 = vmatpush1.xpose.msra.mxu0 0.0
    %495 = vmatprep.subr.mxu0 0.0
    %496 = vmatpush1.xpose.msra.mxu0 0.0
    %497 = vmatprep.subr.mxu0 0.0
    %498 = vmatpush1.xpose.msra.mxu0 0.0
    %499 = vmatprep.subr.mxu0 0.0
    %500 = vmatpush1.xpose.msra.mxu0 0.0
    %501 = vmatprep.subr.mxu0 0.0
    %502 = vmatpush1.xpose.msra.mxu0 0.0
    %503 = vmatprep.subr.mxu0 0.0
    %504 = vmatpush1.xpose.msra.mxu0 0.0
    %505 = vmatprep.mubr.f32.mxu0 0.0
    %506 = vmatmul.mubr.f32.gmra.mrb[0].mxu0 %v164
    %v507 = vpop.f32.mrb[0].mxu0
    %v508 = vadd.f32 0.0, %v507
    %v509 = vpop.f32.mrb[0].mxu0
    %510 = vdwg.mxu0
    %v512 = vsel %vm159, %v249, 0
    %514 = vmatprep.subr.mxu0 0.0
    %515 = vmatpush1.xpose.msra.mxu0 %v512
    %516 = vmatprep.subr.mxu0 0.0
    %517 = vmatpush1.xpose.msra.mxu0 0.0
    %518 = vmatprep.subr.mxu0 0.0
    %519 = vmatpush1.xpose.msra.mxu0 0.0
    %520 = vmatprep.subr.mxu0 0.0
    %521 = vmatpush1.xpose.msra.mxu0 0.0
    %522 = vmatprep.subr.mxu0 0.0
    %523 = vmatpush1.xpose.msra.mxu0 0.0
    %524 = vmatprep.subr.mxu0 0.0
    %525 = vmatpush1.xpose.msra.mxu0 0.0
    %526 = vmatprep.subr.mxu0 0.0
    %527 = vmatpush1.xpose.msra.mxu0 0.0
    %528 = vmatprep.subr.mxu0 0.0
    %529 = vmatpush1.xpose.msra.mxu0 0.0
    %530 = vmatprep.subr.mxu0 0.0
    %531 = vmatpush1.xpose.msra.mxu0 0.0
    %532 = vmatprep.subr.mxu0 0.0
    %533 = vmatpush1.xpose.msra.mxu0 0.0
    %534 = vmatprep.subr.mxu0 0.0
    %535 = vmatpush1.xpose.msra.mxu0 0.0
    %536 = vmatprep.subr.mxu0 0.0
    %537 = vmatpush1.xpose.msra.mxu0 0.0
    %538 = vmatprep.subr.mxu0 0.0
    %539 = vmatpush1.xpose.msra.mxu0 0.0
    %540 = vmatprep.subr.mxu0 0.0
    %541 = vmatpush1.xpose.msra.mxu0 0.0
    %542 = vmatprep.subr.mxu0 0.0
    %543 = vmatpush1.xpose.msra.mxu0 0.0
    %544 = vmatprep.subr.mxu0 0.0
    %545 = vmatpush1.xpose.msra.mxu0 0.0
    %546 = vmatprep.subr.mxu0 0.0
    %547 = vmatpush1.xpose.msra.mxu0 0.0
    %548 = vmatprep.subr.mxu0 0.0
    %549 = vmatpush1.xpose.msra.mxu0 0.0
    %550 = vmatprep.subr.mxu0 0.0
    %551 = vmatpush1.xpose.msra.mxu0 0.0
    %552 = vmatprep.subr.mxu0 0.0
    %553 = vmatpush1.xpose.msra.mxu0 0.0
    %554 = vmatprep.subr.mxu0 0.0
    %555 = vmatpush1.xpose.msra.mxu0 0.0
    %556 = vmatprep.subr.mxu0 0.0
    %557 = vmatpush1.xpose.msra.mxu0 0.0
    %558 = vmatprep.subr.mxu0 0.0
    %559 = vmatpush1.xpose.msra.mxu0 0.0
    %560 = vmatprep.subr.mxu0 0.0
    %561 = vmatpush1.xpose.msra.mxu0 0.0
    %562 = vmatprep.subr.mxu0 0.0
    %563 = vmatpush1.xpose.msra.mxu0 0.0
    %564 = vmatprep.subr.mxu0 0.0
    %565 = vmatpush1.xpose.msra.mxu0 0.0
    %566 = vmatprep.subr.mxu0 0.0
    %567 = vmatpush1.xpose.msra.mxu0 0.0
    %568 = vmatprep.subr.mxu0 0.0
    %569 = vmatpush1.xpose.msra.mxu0 0.0
    %570 = vmatprep.subr.mxu0 0.0
    %571 = vmatpush1.xpose.msra.mxu0 0.0
    %572 = vmatprep.subr.mxu0 0.0
    %573 = vmatpush1.xpose.msra.mxu0 0.0
    %574 = vmatprep.subr.mxu0 0.0
    %575 = vmatpush1.xpose.msra.mxu0 0.0
    %576 = vmatprep.subr.mxu0 0.0
    %577 = vmatpush1.xpose.msra.mxu0 0.0
    %578 = vmatprep.mubr.f32.mxu0 0.0
    %579 = vmatmul.mubr.f32.gmra.mrb[0].mxu0 %v167
    %v580 = vpop.f32.mrb[0].mxu0
    %v581 = vadd.f32 0.0, %v580
    %v582 = vpop.f32.mrb[0].mxu0
    %583 = vdwg.mxu0
    %v585 = vsel %vm159, %v254, 0
    %587 = vmatprep.subr.mxu0 0.0
    %588 = vmatpush1.xpose.msra.mxu0 %v585
    %589 = vmatprep.subr.mxu0 0.0
    %590 = vmatpush1.xpose.msra.mxu0 0.0
    %591 = vmatprep.subr.mxu0 0.0
    %592 = vmatpush1.xpose.msra.mxu0 0.0
    %593 = vmatprep.subr.mxu0 0.0
    %594 = vmatpush1.xpose.msra.mxu0 0.0
    %595 = vmatprep.subr.mxu0 0.0
    %596 = vmatpush1.xpose.msra.mxu0 0.0
    %597 = vmatprep.subr.mxu0 0.0
    %598 = vmatpush1.xpose.msra.mxu0 0.0
    %599 = vmatprep.subr.mxu0 0.0
    %600 = vmatpush1.xpose.msra.mxu0 0.0
    %601 = vmatprep.subr.mxu0 0.0
    %602 = vmatpush1.xpose.msra.mxu0 0.0
    %603 = vmatprep.subr.mxu0 0.0
    %604 = vmatpush1.xpose.msra.mxu0 0.0
    %605 = vmatprep.subr.mxu0 0.0
    %606 = vmatpush1.xpose.msra.mxu0 0.0
    %607 = vmatprep.subr.mxu0 0.0
    %608 = vmatpush1.xpose.msra.mxu0 0.0
    %609 = vmatprep.subr.mxu0 0.0
    %610 = vmatpush1.xpose.msra.mxu0 0.0
    %611 = vmatprep.subr.mxu0 0.0
    %612 = vmatpush1.xpose.msra.mxu0 0.0
    %613 = vmatprep.subr.mxu0 0.0
    %614 = vmatpush1.xpose.msra.mxu0 0.0
    %615 = vmatprep.subr.mxu0 0.0
    %616 = vmatpush1.xpose.msra.mxu0 0.0
    %617 = vmatprep.subr.mxu0 0.0
    %618 = vmatpush1.xpose.msra.mxu0 0.0
    %619 = vmatprep.subr.mxu0 0.0
    %620 = vmatpush1.xpose.msra.mxu0 0.0
    %621 = vmatprep.subr.mxu0 0.0
    %622 = vmatpush1.xpose.msra.mxu0 0.0
    %623 = vmatprep.subr.mxu0 0.0
    %624 = vmatpush1.xpose.msra.mxu0 0.0
    %625 = vmatprep.subr.mxu0 0.0
    %626 = vmatpush1.xpose.msra.mxu0 0.0
    %627 = vmatprep.subr.mxu0 0.0
    %628 = vmatpush1.xpose.msra.mxu0 0.0
    %629 = vmatprep.subr.mxu0 0.0
    %630 = vmatpush1.xpose.msra.mxu0 0.0
    %631 = vmatprep.subr.mxu0 0.0
    %632 = vmatpush1.xpose.msra.mxu0 0.0
    %633 = vmatprep.subr.mxu0 0.0
    %634 = vmatpush1.xpose.msra.mxu0 0.0
    %635 = vmatprep.subr.mxu0 0.0
    %636 = vmatpush1.xpose.msra.mxu0 0.0
    %637 = vmatprep.subr.mxu0 0.0
    %638 = vmatpush1.xpose.msra.mxu0 0.0
    %639 = vmatprep.subr.mxu0 0.0
    %640 = vmatpush1.xpose.msra.mxu0 0.0
    %641 = vmatprep.subr.mxu0 0.0
    %642 = vmatpush1.xpose.msra.mxu0 0.0
    %643 = vmatprep.subr.mxu0 0.0
    %644 = vmatpush1.xpose.msra.mxu0 0.0
    %645 = vmatprep.subr.mxu0 0.0
    %646 = vmatpush1.xpose.msra.mxu0 0.0
    %647 = vmatprep.subr.mxu0 0.0
    %648 = vmatpush1.xpose.msra.mxu0 0.0
    %649 = vmatprep.subr.mxu0 0.0
    %650 = vmatpush1.xpose.msra.mxu0 0.0
    %651 = vmatprep.mubr.f32.mxu0 0.0
    %652 = vmatmul.mubr.f32.gmra.mrb[0].mxu0 %v170
    %v653 = vpop.f32.mrb[0].mxu0
    %v654 = vadd.f32 0.0, %v653
    %v655 = vpop.f32.mrb[0].mxu0
    %656 = vdwg.mxu0
    %v657 = vrcp.pop 0.0
    %v658 = vmul.f32 %v435, %v657
    %v659 = vmul.f32 %v508, %v657
    %v660 = vmul.f32 %v581, %v657
    %v661 = vmul.f32 %v654, %v657
    %vm662 = vcmp.ne.s32.totalorder %v140, 0
    %vm663 = vcmp.ne.s32.totalorder %v141, 0
    %vm664 = vcmp.ne.s32.totalorder %v142, 0
    %vm665 = vcmp.ne.s32.totalorder %v143, 0
    %v666 = vsel %vm662, -10000.0, %v658
    %v667 = vsel %vm663, -10000.0, %v659
    %v668 = vsel %vm664, -10000.0, %v660
    %v669 = vsel %vm665, -10000.0, %v661
    %vm670 = vcmask 64512
    %v671 = vsel %vm670, %v666, -inf
    %672 = vmax.xlane.f32.xlu0 %v671
    %v673 = vpop.xlane.xlu0 %672
    %v674 = vsel %vm670, %v667, -inf
    %675 = vmax.xlane.f32.xlu0 %v674
    %v676 = vpop.xlane.xlu0 %675
    %v677 = vsel %vm670, %v668, -inf
    %678 = vmax.xlane.f32.xlu0 %v677
    %v679 = vpop.xlane.xlu0 %678
    %v680 = vsel %vm670, %v669, -inf
    %681 = vmax.xlane.f32.xlu0 %v680
    %v682 = vpop.xlane.xlu0 %681
    %v683 = vsub.f32 %v666, %v673
    %v684 = vsub.f32 %v667, %v676
    %v685 = vsub.f32 %v668, %v679
    %v686 = vsub.f32 %v669, %v682
    %v687 = vmul.f32 %v683, 1.442695
    %v688 = vpow.pop %v687
    %v689 = vmul.f32 %v684, 1.442695
    %v690 = vpow.pop %v689
    %v691 = vmul.f32 %v685, 1.442695
    %v692 = vpow.pop %v691
    %v693 = vmul.f32 %v686, 1.442695
    %v694 = vpow.pop %v693
    %v695 = vsel %vm670, %v688, 0.0
    %696 = vadd.xlane.f32.xlu0 %v695
    %v697 = vpop.xlane.xlu0 %696
    %v698 = vsel %vm670, %v690, 0.0
    %699 = vadd.xlane.f32.xlu0 %v698
    %v700 = vpop.xlane.xlu0 %699
    %v701 = vsel %vm670, %v692, 0.0
    %702 = vadd.xlane.f32.xlu0 %v701
    %v703 = vpop.xlane.xlu0 %702
    %v704 = vsel %vm670, %v694, 0.0
    %705 = vadd.xlane.f32.xlu0 %v704
    %v706 = vpop.xlane.xlu0 %705
    %v707 = vrcp.pop %v697
    %v708 = vrcp.pop %v700
    %v709 = vrcp.pop %v703
    %v710 = vrcp.pop %v706
    %v711 = vmul.f32 %v688, %v707
    %v712 = vmul.f32 %v690, %v708
    %v713 = vmul.f32 %v692, %v709
    %v714 = vmul.f32 %v694, %v710
    %v716 = vsel %vm670, %v711, 0
    %718 = vmatprep.subr.mxu0 0.0
    %719 = vmatpush1.msra.mxu0 %v347
    %720 = vmatprep.subr.mxu0 0.0
    %721 = vmatpush1.msra.mxu0 0.0
    %722 = vmatprep.subr.mxu0 0.0
    %723 = vmatpush1.msra.mxu0 0.0
    %724 = vmatprep.subr.mxu0 0.0
    %725 = vmatpush1.msra.mxu0 0.0
    %726 = vmatprep.subr.mxu0 0.0
    %727 = vmatpush1.msra.mxu0 0.0
    %728 = vmatprep.subr.mxu0 0.0
    %729 = vmatpush1.msra.mxu0 0.0
    %730 = vmatprep.subr.mxu0 0.0
    %731 = vmatpush1.msra.mxu0 0.0
    %732 = vmatprep.subr.mxu0 0.0
    %733 = vmatpush1.msra.mxu0 0.0
    %734 = vmatprep.subr.mxu0 0.0
    %735 = vmatpush1.msra.mxu0 0.0
    %736 = vmatprep.subr.mxu0 0.0
    %737 = vmatpush1.msra.mxu0 0.0
    %738 = vmatprep.subr.mxu0 0.0
    %739 = vmatpush1.msra.mxu0 0.0
    %740 = vmatprep.subr.mxu0 0.0
    %741 = vmatpush1.msra.mxu0 0.0
    %742 = vmatprep.subr.mxu0 0.0
    %743 = vmatpush1.msra.mxu0 0.0
    %744 = vmatprep.subr.mxu0 0.0
    %745 = vmatpush1.msra.mxu0 0.0
    %746 = vmatprep.subr.mxu0 0.0
    %747 = vmatpush1.msra.mxu0 0.0
    %748 = vmatprep.subr.mxu0 0.0
    %749 = vmatpush1.msra.mxu0 0.0
    %750 = vmatprep.subr.mxu0 0.0
    %751 = vmatpush1.msra.mxu0 0.0
    %752 = vmatprep.subr.mxu0 0.0
    %753 = vmatpush1.msra.mxu0 0.0
    %754 = vmatprep.subr.mxu0 0.0
    %755 = vmatpush1.msra.mxu0 0.0
    %756 = vmatprep.subr.mxu0 0.0
    %757 = vmatpush1.msra.mxu0 0.0
    %758 = vmatprep.subr.mxu0 0.0
    %759 = vmatpush1.msra.mxu0 0.0
    %760 = vmatprep.subr.mxu0 0.0
    %761 = vmatpush1.msra.mxu0 0.0
    %762 = vmatprep.subr.mxu0 0.0
    %763 = vmatpush1.msra.mxu0 0.0
    %764 = vmatprep.subr.mxu0 0.0
    %765 = vmatpush1.msra.mxu0 0.0
    %766 = vmatprep.subr.mxu0 0.0
    %767 = vmatpush1.msra.mxu0 0.0
    %768 = vmatprep.subr.mxu0 0.0
    %769 = vmatpush1.msra.mxu0 0.0
    %770 = vmatprep.subr.mxu0 0.0
    %771 = vmatpush1.msra.mxu0 0.0
    %772 = vmatprep.subr.mxu0 0.0
    %773 = vmatpush1.msra.mxu0 0.0
    %774 = vmatprep.subr.mxu0 0.0
    %775 = vmatpush1.msra.mxu0 0.0
    %776 = vmatprep.subr.mxu0 0.0
    %777 = vmatpush1.msra.mxu0 0.0
    %778 = vmatprep.subr.mxu0 0.0
    %779 = vmatpush1.msra.mxu0 0.0
    %780 = vmatprep.subr.mxu0 0.0
    %781 = vmatpush1.msra.mxu0 0.0
    %782 = vmatprep.mubr.f32.mxu0 0.0
    %783 = vmatmul.mubr.f32.gmra.mrb[0].mxu0 %v716
    %v784 = vpop.f32.mrb[0].mxu0
    %v785 = vadd.f32 0.0, %v784
    %v786 = vpop.f32.mrb[0].mxu0
    %787 = vdwg.mxu0
    %v789 = vsel %vm670, %v712, 0
    %791 = vmatprep.subr.mxu0 0.0
    %792 = vmatpush1.msra.mxu0 %v352
    %793 = vmatprep.subr.mxu0 0.0
    %794 = vmatpush1.msra.mxu0 0.0
    %795 = vmatprep.subr.mxu0 0.0
    %796 = vmatpush1.msra.mxu0 0.0
    %797 = vmatprep.subr.mxu0 0.0
    %798 = vmatpush1.msra.mxu0 0.0
    %799 = vmatprep.subr.mxu0 0.0
    %800 = vmatpush1.msra.mxu0 0.0
    %801 = vmatprep.subr.mxu0 0.0
    %802 = vmatpush1.msra.mxu0 0.0
    %803 = vmatprep.subr.mxu0 0.0
    %804 = vmatpush1.msra.mxu0 0.0
    %805 = vmatprep.subr.mxu0 0.0
    %806 = vmatpush1.msra.mxu0 0.0
    %807 = vmatprep.subr.mxu0 0.0
    %808 = vmatpush1.msra.mxu0 0.0
    %809 = vmatprep.subr.mxu0 0.0
    %810 = vmatpush1.msra.mxu0 0.0
    %811 = vmatprep.subr.mxu0 0.0
    %812 = vmatpush1.msra.mxu0 0.0
    %813 = vmatprep.subr.mxu0 0.0
    %814 = vmatpush1.msra.mxu0 0.0
    %815 = vmatprep.subr.mxu0 0.0
    %816 = vmatpush1.msra.mxu0 0.0
    %817 = vmatprep.subr.mxu0 0.0
    %818 = vmatpush1.msra.mxu0 0.0
    %819 = vmatprep.subr.mxu0 0.0
    %820 = vmatpush1.msra.mxu0 0.0
    %821 = vmatprep.subr.mxu0 0.0
    %822 = vmatpush1.msra.mxu0 0.0
    %823 = vmatprep.subr.mxu0 0.0
    %824 = vmatpush1.msra.mxu0 0.0
    %825 = vmatprep.subr.mxu0 0.0
    %826 = vmatpush1.msra.mxu0 0.0
    %827 = vmatprep.subr.mxu0 0.0
    %828 = vmatpush1.msra.mxu0 0.0
    %829 = vmatprep.subr.mxu0 0.0
    %830 = vmatpush1.msra.mxu0 0.0
    %831 = vmatprep.subr.mxu0 0.0
    %832 = vmatpush1.msra.mxu0 0.0
    %833 = vmatprep.subr.mxu0 0.0
    %834 = vmatpush1.msra.mxu0 0.0
    %835 = vmatprep.subr.mxu0 0.0
    %836 = vmatpush1.msra.mxu0 0.0
    %837 = vmatprep.subr.mxu0 0.0
    %838 = vmatpush1.msra.mxu0 0.0
    %839 = vmatprep.subr.mxu0 0.0
    %840 = vmatpush1.msra.mxu0 0.0
    %841 = vmatprep.subr.mxu0 0.0
    %842 = vmatpush1.msra.mxu0 0.0
    %843 = vmatprep.subr.mxu0 0.0
    %844 = vmatpush1.msra.mxu0 0.0
    %845 = vmatprep.subr.mxu0 0.0
    %846 = vmatpush1.msra.mxu0 0.0
    %847 = vmatprep.subr.mxu0 0.0
    %848 = vmatpush1.msra.mxu0 0.0
    %849 = vmatprep.subr.mxu0 0.0
    %850 = vmatpush1.msra.mxu0 0.0
    %851 = vmatprep.subr.mxu0 0.0
    %852 = vmatpush1.msra.mxu0 0.0
    %853 = vmatprep.subr.mxu0 0.0
    %854 = vmatpush1.msra.mxu0 0.0
    %855 = vmatprep.mubr.f32.mxu0 0.0
    %856 = vmatmul.mubr.f32.gmra.mrb[0].mxu0 %v789
    %v857 = vpop.f32.mrb[0].mxu0
    %v858 = vadd.f32 0.0, %v857
    %v859 = vpop.f32.mrb[0].mxu0
    %860 = vdwg.mxu0
    %v862 = vsel %vm670, %v713, 0
    %864 = vmatprep.subr.mxu0 0.0
    %865 = vmatpush1.msra.mxu0 %v357
    %866 = vmatprep.subr.mxu0 0.0
    %867 = vmatpush1.msra.mxu0 0.0
    %868 = vmatprep.subr.mxu0 0.0
    %869 = vmatpush1.msra.mxu0 0.0
    %870 = vmatprep.subr.mxu0 0.0
    %871 = vmatpush1.msra.mxu0 0.0
    %872 = vmatprep.subr.mxu0 0.0
    %873 = vmatpush1.msra.mxu0 0.0
    %874 = vmatprep.subr.mxu0 0.0
    %875 = vmatpush1.msra.mxu0 0.0
    %876 = vmatprep.subr.mxu0 0.0
    %877 = vmatpush1.msra.mxu0 0.0
    %878 = vmatprep.subr.mxu0 0.0
    %879 = vmatpush1.msra.mxu0 0.0
    %880 = vmatprep.subr.mxu0 0.0
    %881 = vmatpush1.msra.mxu0 0.0
    %882 = vmatprep.subr.mxu0 0.0
    %883 = vmatpush1.msra.mxu0 0.0
    %884 = vmatprep.subr.mxu0 0.0
    %885 = vmatpush1.msra.mxu0 0.0
    %886 = vmatprep.subr.mxu0 0.0
    %887 = vmatpush1.msra.mxu0 0.0
    %888 = vmatprep.subr.mxu0 0.0
    %889 = vmatpush1.msra.mxu0 0.0
    %890 = vmatprep.subr.mxu0 0.0
    %891 = vmatpush1.msra.mxu0 0.0
    %892 = vmatprep.subr.mxu0 0.0
    %893 = vmatpush1.msra.mxu0 0.0
    %894 = vmatprep.subr.mxu0 0.0
    %895 = vmatpush1.msra.mxu0 0.0
    %896 = vmatprep.subr.mxu0 0.0
    %897 = vmatpush1.msra.mxu0 0.0
    %898 = vmatprep.subr.mxu0 0.0
    %899 = vmatpush1.msra.mxu0 0.0
    %900 = vmatprep.subr.mxu0 0.0
    %901 = vmatpush1.msra.mxu0 0.0
    %902 = vmatprep.subr.mxu0 0.0
    %903 = vmatpush1.msra.mxu0 0.0
    %904 = vmatprep.subr.mxu0 0.0
    %905 = vmatpush1.msra.mxu0 0.0
    %906 = vmatprep.subr.mxu0 0.0
    %907 = vmatpush1.msra.mxu0 0.0
    %908 = vmatprep.subr.mxu0 0.0
    %909 = vmatpush1.msra.mxu0 0.0
    %910 = vmatprep.subr.mxu0 0.0
    %911 = vmatpush1.msra.mxu0 0.0
    %912 = vmatprep.subr.mxu0 0.0
    %913 = vmatpush1.msra.mxu0 0.0
    %914 = vmatprep.subr.mxu0 0.0
    %915 = vmatpush1.msra.mxu0 0.0
    %916 = vmatprep.subr.mxu0 0.0
    %917 = vmatpush1.msra.mxu0 0.0
    %918 = vmatprep.subr.mxu0 0.0
    %919 = vmatpush1.msra.mxu0 0.0
    %920 = vmatprep.subr.mxu0 0.0
    %921 = vmatpush1.msra.mxu0 0.0
    %922 = vmatprep.subr.mxu0 0.0
    %923 = vmatpush1.msra.mxu0 0.0
    %924 = vmatprep.subr.mxu0 0.0
    %925 = vmatpush1.msra.mxu0 0.0
    %926 = vmatprep.subr.mxu0 0.0
    %927 = vmatpush1.msra.mxu0 0.0
    %928 = vmatprep.mubr.f32.mxu0 0.0
    %929 = vmatmul.mubr.f32.gmra.mrb[0].mxu0 %v862
    %v930 = vpop.f32.mrb[0].mxu0
    %v931 = vadd.f32 0.0, %v930
    %v932 = vpop.f32.mrb[0].mxu0
    %933 = vdwg.mxu0
    %v935 = vsel %vm670, %v714, 0
    %937 = vmatprep.subr.mxu0 0.0
    %938 = vmatpush1.msra.mxu0 %v362
    %939 = vmatprep.subr.mxu0 0.0
    %940 = vmatpush1.msra.mxu0 0.0
    %941 = vmatprep.subr.mxu0 0.0
    %942 = vmatpush1.msra.mxu0 0.0
    %943 = vmatprep.subr.mxu0 0.0
    %944 = vmatpush1.msra.mxu0 0.0
    %945 = vmatprep.subr.mxu0 0.0
    %946 = vmatpush1.msra.mxu0 0.0
    %947 = vmatprep.subr.mxu0 0.0
    %948 = vmatpush1.msra.mxu0 0.0
    %949 = vmatprep.subr.mxu0 0.0
    %950 = vmatpush1.msra.mxu0 0.0
    %951 = vmatprep.subr.mxu0 0.0
    %952 = vmatpush1.msra.mxu0 0.0
    %953 = vmatprep.subr.mxu0 0.0
    %954 = vmatpush1.msra.mxu0 0.0
    %955 = vmatprep.subr.mxu0 0.0
    %956 = vmatpush1.msra.mxu0 0.0
    %957 = vmatprep.subr.mxu0 0.0
    %958 = vmatpush1.msra.mxu0 0.0
    %959 = vmatprep.subr.mxu0 0.0
    %960 = vmatpush1.msra.mxu0 0.0
    %961 = vmatprep.subr.mxu0 0.0
    %962 = vmatpush1.msra.mxu0 0.0
    %963 = vmatprep.subr.mxu0 0.0
    %964 = vmatpush1.msra.mxu0 0.0
    %965 = vmatprep.subr.mxu0 0.0
    %966 = vmatpush1.msra.mxu0 0.0
    %967 = vmatprep.subr.mxu0 0.0
    %968 = vmatpush1.msra.mxu0 0.0
    %969 = vmatprep.subr.mxu0 0.0
    %970 = vmatpush1.msra.mxu0 0.0
    %971 = vmatprep.subr.mxu0 0.0
    %972 = vmatpush1.msra.mxu0 0.0
    %973 = vmatprep.subr.mxu0 0.0
    %974 = vmatpush1.msra.mxu0 0.0
    %975 = vmatprep.subr.mxu0 0.0
    %976 = vmatpush1.msra.mxu0 0.0
    %977 = vmatprep.subr.mxu0 0.0
    %978 = vmatpush1.msra.mxu0 0.0
    %979 = vmatprep.subr.mxu0 0.0
    %980 = vmatpush1.msra.mxu0 0.0
    %981 = vmatprep.subr.mxu0 0.0
    %982 = vmatpush1.msra.mxu0 0.0
    %983 = vmatprep.subr.mxu0 0.0
    %984 = vmatpush1.msra.mxu0 0.0
    %985 = vmatprep.subr.mxu0 0.0
    %986 = vmatpush1.msra.mxu0 0.0
    %987 = vmatprep.subr.mxu0 0.0
    %988 = vmatpush1.msra.mxu0 0.0
    %989 = vmatprep.subr.mxu0 0.0
    %990 = vmatpush1.msra.mxu0 0.0
    %991 = vmatprep.subr.mxu0 0.0
    %992 = vmatpush1.msra.mxu0 0.0
    %993 = vmatprep.subr.mxu0 0.0
    %994 = vmatpush1.msra.mxu0 0.0
    %995 = vmatprep.subr.mxu0 0.0
    %996 = vmatpush1.msra.mxu0 0.0
    %997 = vmatprep.subr.mxu0 0.0
    %998 = vmatpush1.msra.mxu0 0.0
    %999 = vmatprep.subr.mxu0 0.0
    %1000 = vmatpush1.msra.mxu0 0.0
    %1001 = vmatprep.mubr.f32.mxu0 0.0
    %1002 = vmatmul.mubr.f32.gmra.mrb[0].mxu0 %v935
    %v1003 = vpop.f32.mrb[0].mxu0
    %v1004 = vadd.f32 0.0, %v1003
    %v1005 = vpop.f32.mrb[0].mxu0
    %1006 = vdwg.mxu0
    %v1007 = vadd.f32 %v785, %v132
    %v1008 = vadd.f32 %v858, %v133
    %v1009 = vadd.f32 %v931, %v134
    %v1010 = vadd.f32 %v1004, %v135
    %v1011 = vadd.f32 %v785, %v136
    %v1012 = vadd.f32 %v858, %v137
    %v1013 = vadd.f32 %v931, %v138
    %v1014 = vadd.f32 %v1004, %v139
    %v1015 = vsel %vm159, %v1007, 0.0
    %1016 = vadd.xlane.f32.xlu0 %v1015
    %v1017 = vpop.xlane.xlu0 %1016
    %v1018 = vsel %vm159, %v1008, 0.0
    %1019 = vadd.xlane.f32.xlu0 %v1018
    %v1020 = vpop.xlane.xlu0 %1019
    %v1021 = vsel %vm159, %v1009, 0.0
    %1022 = vadd.xlane.f32.xlu0 %v1021
    %v1023 = vpop.xlane.xlu0 %1022
    %v1024 = vsel %vm159, %v1010, 0.0
    %1025 = vadd.xlane.f32.xlu0 %v1024
    %v1026 = vpop.xlane.xlu0 %1025
    %v1027 = vsel %vm159, %v1011, 0.0
    %1028 = vadd.xlane.f32.xlu0 %v1027
    %v1029 = vpop.xlane.xlu0 %1028
    %v1030 = vsel %vm159, %v1012, 0.0
    %1031 = vadd.xlane.f32.xlu0 %v1030
    %v1032 = vpop.xlane.xlu0 %1031
    %v1033 = vsel %vm159, %v1013, 0.0
    %1034 = vadd.xlane.f32.xlu0 %v1033
    %v1035 = vpop.xlane.xlu0 %1034
    %v1036 = vsel %vm159, %v1014, 0.0
    %1037 = vadd.xlane.f32.xlu0 %v1036
    %v1038 = vpop.xlane.xlu0 %1037
    %v1039 = vrcp.pop 32.0
    %v1040 = vmul.f32 %v1017, %v1039
    %v1041 = vmul.f32 %v1020, %v1039
    %v1042 = vmul.f32 %v1023, %v1039
    %v1043 = vmul.f32 %v1026, %v1039
    %v1044 = vmul.f32 %v1029, %v1039
    %v1045 = vmul.f32 %v1032, %v1039
    %v1046 = vmul.f32 %v1035, %v1039
    %v1047 = vmul.f32 %v1038, %v1039
    %v1048 = vsub.f32 %v1007, %v1040
    %v1049 = vsub.f32 %v1008, %v1041
    %v1050 = vsub.f32 %v1009, %v1042
    %v1051 = vsub.f32 %v1010, %v1043
    %v1052 = vsub.f32 %v1011, %v1044
    %v1053 = vsub.f32 %v1012, %v1045
    %v1054 = vsub.f32 %v1013, %v1046
    %v1055 = vsub.f32 %v1014, %v1047
    %v1056 = vmul.f32 %v1048, %v1048
    %v1057 = vmul.f32 %v1049, %v1049
    %v1058 = vmul.f32 %v1050, %v1050
    %v1059 = vmul.f32 %v1051, %v1051
    %v1060 = vmul.f32 %v1052, %v1052
    %v1061 = vmul.f32 %v1053, %v1053
    %v1062 = vmul.f32 %v1054, %v1054
    %v1063 = vmul.f32 %v1055, %v1055
    %v1064 = vsel %vm159, %v1056, 0.0
    %1065 = vadd.xlane.f32.xlu0 %v1064
    %v1066 = vpop.xlane.xlu0 %1065
    %v1067 = vsel %vm159, %v1057, 0.0
    %1068 = vadd.xlane.f32.xlu0 %v1067
    %v1069 = vpop.xlane.xlu0 %1068
    %v1070 = vsel %vm159, %v1058, 0.0
    %1071 = vadd.xlane.f32.xlu0 %v1070
    %v1072 = vpop.xlane.xlu0 %1071
    %v1073 = vsel %vm159, %v1059, 0.0
    %1074 = vadd.xlane.f32.xlu0 %v1073
    %v1075 = vpop.xlane.xlu0 %1074
    %v1076 = vsel %vm159, %v1060, 0.0
    %1077 = vadd.xlane.f32.xlu0 %v1076
    %v1078 = vpop.xlane.xlu0 %1077
    %v1079 = vsel %vm159, %v1061, 0.0
    %1080 = vadd.xlane.f32.xlu0 %v1079
    %v1081 = vpop.xlane.xlu0 %1080
    %v1082 = vsel %vm159, %v1062, 0.0
    %1083 = vadd.xlane.f32.xlu0 %v1082
    %v1084 = vpop.xlane.xlu0 %1083
    %v1085 = vsel %vm159, %v1063, 0.0
    %1086 = vadd.xlane.f32.xlu0 %v1085
    %v1087 = vpop.xlane.xlu0 %1086
    %v1088 = vmul.f32 %v1066, %v1039
    %v1089 = vmul.f32 %v1069, %v1039
    %v1090 = vmul.f32 %v1072, %v1039
    %v1091 = vmul.f32 %v1075, %v1039
    %v1092 = vmul.f32 %v1078, %v1039
    %v1093 = vmul.f32 %v1081, %v1039
    %v1094 = vmul.f32 %v1084, %v1039
    %v1095 = vmul.f32 %v1087, %v1039
    %v1096 = vadd.f32 %v1088, 1e-12
    %v1097 = vadd.f32 %v1089, 1e-12
    %v1098 = vadd.f32 %v1090, 1e-12
    %v1099 = vadd.f32 %v1091, 1e-12
    %v1100 = vadd.f32 %v1092, 1e-12
    %v1101 = vadd.f32 %v1093, 1e-12
    %v1102 = vadd.f32 %v1094, 1e-12
    %v1103 = vadd.f32 %v1095, 1e-12
    %v1104 = vrsqrt.pop %v1096
    %v1105 = vrsqrt.pop %v1097
    %v1106 = vrsqrt.pop %v1098
    %v1107 = vrsqrt.pop %v1099
    %v1108 = vrsqrt.pop %v1100
    %v1109 = vrsqrt.pop %v1101
    %v1110 = vrsqrt.pop %v1102
    %v1111 = vrsqrt.pop %v1103
    %v1112 = vmul.f32 %v1048, %v1104
    %v1113 = vmul.f32 %v1049, %v1105
    %v1114 = vmul.f32 %v1050, %v1106
    %v1115 = vmul.f32 %v1051, %v1107
    %v1116 = vmul.f32 %v1052, %v1108
    %v1117 = vmul.f32 %v1053, %v1109
    %v1118 = vmul.f32 %v1054, %v1110
    %v1119 = vmul.f32 %v1055, %v1111
    %v1120 = vld [vmem:[#allocation7] sm:$0xff]
    %v1121 = vld [vmem:[#allocation7 + $0x8] sm:$0xff]
    %v1122 = vld [vmem:[#allocation7 + $0x10] sm:$0xff]
    %v1123 = vld [vmem:[#allocation7 + $0x18] sm:$0xff]
    %v1124 = vld [vmem:[%s8] sm:$0x1]
    %v1126 = vlaneseq
    %v1127 = vshrl.u32 %v1126, 7
    %v1128 = vsub.s32 0, %v1127
    %v1129 = vrot.slane %v1124, %v1128
    %v1132 = vsel %vm159, %v1116, 0
    %v1135 = vsel %vm159, %v1117, 0
    %v1138 = vsel %vm159, %v1118, 0
    %v1141 = vsel %vm159, %v1119, 0
    %1143 = vmatprep.subr.mxu0 0.0
    %1144 = vmatpush1.msra.mxu0 %v1120
    %1145 = vmatprep.subr.mxu0 0.0
    %1146 = vmatpush1.msra.mxu0 %v1121
    %1147 = vmatprep.subr.mxu0 0.0
    %1148 = vmatpush1.msra.mxu0 %v1122
    %1149 = vmatprep.subr.mxu0 0.0
    %1150 = vmatpush1.msra.mxu0 %v1123
    %1151 = vmatprep.subr.mxu0 0.0
    %1152 = vmatpush1.msra.mxu0 0.0
    %1153 = vmatprep.subr.mxu0 0.0
    %1154 = vmatpush1.msra.mxu0 0.0
    %1155 = vmatprep.subr.mxu0 0.0
    %1156 = vmatpush1.msra.mxu0 0.0
    %1157 = vmatprep.subr.mxu0 0.0
    %1158 = vmatpush1.msra.mxu0 0.0
    %1159 = vmatprep.subr.mxu0 0.0
    %1160 = vmatpush1.msra.mxu0 0.0
    %1161 = vmatprep.subr.mxu0 0.0
    %1162 = vmatpush1.msra.mxu0 0.0
    %1163 = vmatprep.subr.mxu0 0.0
    %1164 = vmatpush1.msra.mxu0 0.0
    %1165 = vmatprep.subr.mxu0 0.0
    %1166 = vmatpush1.msra.mxu0 0.0
    %1167 = vmatprep.subr.mxu0 0.0
    %1168 = vmatpush1.msra.mxu0 0.0
    %1169 = vmatprep.subr.mxu0 0.0
    %1170 = vmatpush1.msra.mxu0 0.0
    %1171 = vmatprep.subr.mxu0 0.0
    %1172 = vmatpush1.msra.mxu0 0.0
    %1173 = vmatprep.subr.mxu0 0.0
    %1174 = vmatpush1.msra.mxu0 0.0
    %1175 = vmatprep.subr.mxu0 0.0
    %1176 = vmatpush1.msra.mxu0 0.0
    %1177 = vmatprep.subr.mxu0 0.0
    %1178 = vmatpush1.msra.mxu0 0.0
    %1179 = vmatprep.subr.mxu0 0.0
    %1180 = vmatpush1.msra.mxu0 0.0
    %1181 = vmatprep.subr.mxu0 0.0
    %1182 = vmatpush1.msra.mxu0 0.0
    %1183 = vmatprep.subr.mxu0 0.0
    %1184 = vmatpush1.msra.mxu0 0.0
    %1185 = vmatprep.subr.mxu0 0.0
    %1186 = vmatpush1.msra.mxu0 0.0
    %1187 = vmatprep.subr.mxu0 0.0
    %1188 = vmatpush1.msra.mxu0 0.0
    %1189 = vmatprep.subr.mxu0 0.0
    %1190 = vmatpush1.msra.mxu0 0.0
    %1191 = vmatprep.subr.mxu0 0.0
    %1192 = vmatpush1.msra.mxu0 0.0
    %1193 = vmatprep.subr.mxu0 0.0
    %1194 = vmatpush1.msra.mxu0 0.0
    %1195 = vmatprep.subr.mxu0 0.0
    %1196 = vmatpush1.msra.mxu0 0.0
    %1197 = vmatprep.subr.mxu0 0.0
    %1198 = vmatpush1.msra.mxu0 0.0
    %1199 = vmatprep.subr.mxu0 0.0
    %1200 = vmatpush1.msra.mxu0 0.0
    %1201 = vmatprep.subr.mxu0 0.0
    %1202 = vmatpush1.msra.mxu0 0.0
    %1203 = vmatprep.subr.mxu0 0.0
    %1204 = vmatpush1.msra.mxu0 0.0
    %1205 = vmatprep.subr.mxu0 0.0
    %1206 = vmatpush1.msra.mxu0 0.0
    %1207 = vmatprep.mubr.f32.mxu0 0.0
    %1208 = vmatmul.mubr.f32.gmra.mrb[0].mxu0 %v1132
    %v1209 = vpop.f32.mrb[0].mxu0
    %v1210 = vadd.f32 %v1129, %v1209
    %v1211 = vpop.f32.mrb[0].mxu0
    %1212 = vmatprep.mubr.f32.mxu0 0.0
    %1213 = vmatmul.mubr.f32.gmra.mrb[0].mxu0 %v1135
    %v1214 = vpop.f32.mrb[0].mxu0
    %v1215 = vadd.f32 %v1129, %v1214
    %v1216 = vpop.f32.mrb[0].mxu0
    %1217 = vmatprep.mubr.f32.mxu0 0.0
    %1218 = vmatmul.mubr.f32.gmra.mrb[0].mxu0 %v1138
    %v1219 = vpop.f32.mrb[0].mxu0
    %v1220 = vadd.f32 %v1129, %v1219
    %v1221 = vpop.f32.mrb[0].mxu0
    %1222 = vmatprep.mubr.f32.mxu0 0.0
    %1223 = vmatmul.mubr.f32.gmra.mrb[0].mxu0 %v1141
    %v1224 = vpop.f32.mrb[0].mxu0
    %v1225 = vadd.f32 %v1129, %v1224
    %v1226 = vpop.f32.mrb[0].mxu0
    %1227 = vdwg.mxu0
    %v1228 = vld [vmem:[#allocation9] sm:$0xff]
    %v1229 = vld [vmem:[#allocation9 + $0x8] sm:$0xff]
    %v1230 = vld [vmem:[#allocation9 + $0x10] sm:$0xff]
    %v1231 = vld [vmem:[#allocation9 + $0x18] sm:$0xff]
    %v1232 = vld [vmem:[%s10] sm:$0x1]
    %v1234 = vlaneseq
    %v1235 = vshrl.u32 %v1234, 7
    %v1236 = vsub.s32 0, %v1235
    %v1237 = vrot.slane %v1232, %v1236
    %v1240 = vsel %vm159, %v1112, 0
    %v1243 = vsel %vm159, %v1113, 0
    %v1246 = vsel %vm159, %v1114, 0
    %v1249 = vsel %vm159, %v1115, 0
    %1251 = vmatprep.subr.mxu0 0.0
    %1252 = vmatpush1.msra.mxu0 %v1228
    %1253 = vmatprep.subr.mxu0 0.0
    %1254 = vmatpush1.msra.mxu0 %v1229
    %1255 = vmatprep.subr.mxu0 0.0
    %1256 = vmatpush1.msra.mxu0 %v1230
    %1257 = vmatprep.subr.mxu0 0.0
    %1258 = vmatpush1.msra.mxu0 %v1231
    %1259 = vmatprep.subr.mxu0 0.0
    %1260 = vmatpush1.msra.mxu0 0.0
    %1261 = vmatprep.subr.mxu0 0.0
    %1262 = vmatpush1.msra.mxu0 0.0
    %1263 = vmatprep.subr.mxu0 0.0
    %1264 = vmatpush1.msra.mxu0 0.0
    %1265 = vmatprep.subr.mxu0 0.0
    %1266 = vmatpush1.msra.mxu0 0.0
    %1267 = vmatprep.subr.mxu0 0.0
    %1268 = vmatpush1.msra.mxu0 0.0
    %1269 = vmatprep.subr.mxu0 0.0
    %1270 = vmatpush1.msra.mxu0 0.0
    %1271 = vmatprep.subr.mxu0 0.0
    %1272 = vmatpush1.msra.mxu0 0.0
    %1273 = vmatprep.subr.mxu0 0.0
    %1274 = vmatpush1.msra.mxu0 0.0
    %1275 = vmatprep.subr.mxu0 0.0
    %1276 = vmatpush1.msra.mxu0 0.0
    %1277 = vmatprep.subr.mxu0 0.0
    %1278 = vmatpush1.msra.mxu0 0.0
    %1279 = vmatprep.subr.mxu0 0.0
    %1280 = vmatpush1.msra.mxu0 0.0
    %1281 = vmatprep.subr.mxu0 0.0
    %1282 = vmatpush1.msra.mxu0 0.0
    %1283 = vmatprep.subr.mxu0 0.0
    %1284 = vmatpush1.msra.mxu0 0.0
    %1285 = vmatprep.subr.mxu0 0.0
    %1286 = vmatpush1.msra.mxu0 0.0
    %1287 = vmatprep.subr.mxu0 0.0
    %1288 = vmatpush1.msra.mxu0 0.0
    %1289 = vmatprep.subr.mxu0 0.0
    %1290 = vmatpush1.msra.mxu0 0.0
    %1291 = vmatprep.subr.mxu0 0.0
    %1292 = vmatpush1.msra.mxu0 0.0
    %1293 = vmatprep.subr.mxu0 0.0
    %1294 = vmatpush1.msra.mxu0 0.0
    %1295 = vmatprep.subr.mxu0 0.0
    %1296 = vmatpush1.msra.mxu0 0.0
    %1297 = vmatprep.subr.mxu0 0.0
    %1298 = vmatpush1.msra.mxu0 0.0
    %1299 = vmatprep.subr.mxu0 0.0
    %1300 = vmatpush1.msra.mxu0 0.0
    %1301 = vmatprep.subr.mxu0 0.0
    %1302 = vmatpush1.msra.mxu0 0.0
    %1303 = vmatprep.subr.mxu0 0.0
    %1304 = vmatpush1.msra.mxu0 0.0
    %1305 = vmatprep.subr.mxu0 0.0
    %1306 = vmatpush1.msra.mxu0 0.0
    %1307 = vmatprep.subr.mxu0 0.0
    %1308 = vmatpush1.msra.mxu0 0.0
    %1309 = vmatprep.subr.mxu0 0.0
    %1310 = vmatpush1.msra.mxu0 0.0
    %1311 = vmatprep.subr.mxu0 0.0
    %1312 = vmatpush1.msra.mxu0 0.0
    %1313 = vmatprep.subr.mxu0 0.0
    %1314 = vmatpush1.msra.mxu0 0.0
    %1315 = vmatprep.mubr.f32.mxu0 0.0
    %1316 = vmatmul.mubr.f32.gmra.mrb[0].mxu0 %v1240
    %v1317 = vpop.f32.mrb[0].mxu0
    %v1318 = vadd.f32 %v1237, %v1317
    %v1319 = vpop.f32.mrb[0].mxu0
    %1320 = vmatprep.mubr.f32.mxu0 0.0
    %1321 = vmatmul.mubr.f32.gmra.mrb[0].mxu0 %v1243
    %v1322 = vpop.f32.mrb[0].mxu0
    %v1323 = vadd.f32 %v1237, %v1322
    %v1324 = vpop.f32.mrb[0].mxu0
    %1325 = vmatprep.mubr.f32.mxu0 0.0
    %1326 = vmatmul.mubr.f32.gmra.mrb[0].mxu0 %v1246
    %v1327 = vpop.f32.mrb[0].mxu0
    %v1328 = vadd.f32 %v1237, %v1327
    %v1329 = vpop.f32.mrb[0].mxu0
    %1330 = vmatprep.mubr.f32.mxu0 0.0
    %1331 = vmatmul.mubr.f32.gmra.mrb[0].mxu0 %v1249
    %v1332 = vpop.f32.mrb[0].mxu0
    %v1333 = vadd.f32 %v1237, %v1332
    %v1334 = vpop.f32.mrb[0].mxu0
    %1335 = vdwg.mxu0
    %v1337 = vsel %vm159, %v1210, 0
    %1339 = vmatprep.subr.mxu0 0.0
    %1340 = vmatpush1.xpose.msra.mxu0 %v1337
    %1341 = vmatprep.subr.mxu0 0.0
    %1342 = vmatpush1.xpose.msra.mxu0 0.0
    %1343 = vmatprep.subr.mxu0 0.0
    %1344 = vmatpush1.xpose.msra.mxu0 0.0
    %1345 = vmatprep.subr.mxu0 0.0
    %1346 = vmatpush1.xpose.msra.mxu0 0.0
    %1347 = vmatprep.subr.mxu0 0.0
    %1348 = vmatpush1.xpose.msra.mxu0 0.0
    %1349 = vmatprep.subr.mxu0 0.0
    %1350 = vmatpush1.xpose.msra.mxu0 0.0
    %1351 = vmatprep.subr.mxu0 0.0
    %1352 = vmatpush1.xpose.msra.mxu0 0.0
    %1353 = vmatprep.subr.mxu0 0.0
    %1354 = vmatpush1.xpose.msra.mxu0 0.0
    %1355 = vmatprep.subr.mxu0 0.0
    %1356 = vmatpush1.xpose.msra.mxu0 0.0
    %1357 = vmatprep.subr.mxu0 0.0
    %1358 = vmatpush1.xpose.msra.mxu0 0.0
    %1359 = vmatprep.subr.mxu0 0.0
    %1360 = vmatpush1.xpose.msra.mxu0 0.0
    %1361 = vmatprep.subr.mxu0 0.0
    %1362 = vmatpush1.xpose.msra.mxu0 0.0
    %1363 = vmatprep.subr.mxu0 0.0
    %1364 = vmatpush1.xpose.msra.mxu0 0.0
    %1365 = vmatprep.subr.mxu0 0.0
    %1366 = vmatpush1.xpose.msra.mxu0 0.0
    %1367 = vmatprep.subr.mxu0 0.0
    %1368 = vmatpush1.xpose.msra.mxu0 0.0
    %1369 = vmatprep.subr.mxu0 0.0
    %1370 = vmatpush1.xpose.msra.mxu0 0.0
    %1371 = vmatprep.subr.mxu0 0.0
    %1372 = vmatpush1.xpose.msra.mxu0 0.0
    %1373 = vmatprep.subr.mxu0 0.0
    %1374 = vmatpush1.xpose.msra.mxu0 0.0
    %1375 = vmatprep.subr.mxu0 0.0
    %1376 = vmatpush1.xpose.msra.mxu0 0.0
    %1377 = vmatprep.subr.mxu0 0.0
    %1378 = vmatpush1.xpose.msra.mxu0 0.0
    %1379 = vmatprep.subr.mxu0 0.0
    %1380 = vmatpush1.xpose.msra.mxu0 0.0
    %1381 = vmatprep.subr.mxu0 0.0
    %1382 = vmatpush1.xpose.msra.mxu0 0.0
    %1383 = vmatprep.subr.mxu0 0.0
    %1384 = vmatpush1.xpose.msra.mxu0 0.0
    %1385 = vmatprep.subr.mxu0 0.0
    %1386 = vmatpush1.xpose.msra.mxu0 0.0
    %1387 = vmatprep.subr.mxu0 0.0
    %1388 = vmatpush1.xpose.msra.mxu0 0.0
    %1389 = vmatprep.subr.mxu0 0.0
    %1390 = vmatpush1.xpose.msra.mxu0 0.0
    %1391 = vmatprep.subr.mxu0 0.0
    %1392 = vmatpush1.xpose.msra.mxu0 0.0
    %1393 = vmatprep.subr.mxu0 0.0
    %1394 = vmatpush1.xpose.msra.mxu0 0.0
    %1395 = vmatprep.subr.mxu0 0.0
    %1396 = vmatpush1.xpose.msra.mxu0 0.0
    %1397 = vmatprep.subr.mxu0 0.0
    %1398 = vmatpush1.xpose.msra.mxu0 0.0
    %1399 = vmatprep.subr.mxu0 0.0
    %1400 = vmatpush1.xpose.msra.mxu0 0.0
    %1401 = vmatprep.subr.mxu0 0.0
    %1402 = vmatpush1.xpose.msra.mxu0 0.0
    %1403 = vmatprep.mubr.f32.mxu0 0.0
    %1404 = vmatmul.mubr.f32.gmra.mrb[0].mxu0 %v1132
    %v1405 = vpop.f32.mrb[0].mxu0
    %v1406 = vadd.f32 0.0, %v1405
    %v1407 = vpop.f32.mrb[0].mxu0
    %1408 = vdwg.mxu0
    %v1410 = vsel %vm159, %v1215, 0
    %1412 = vmatprep.subr.mxu0 0.0
    %1413 = vmatpush1.xpose.msra.mxu0 %v1410
    %1414 = vmatprep.subr.mxu0 0.0
    %1415 = vmatpush1.xpose.msra.mxu0 0.0
    %1416 = vmatprep.subr.mxu0 0.0
    %1417 = vmatpush1.xpose.msra.mxu0 0.0
    %1418 = vmatprep.subr.mxu0 0.0
    %1419 = vmatpush1.xpose.msra.mxu0 0.0
    %1420 = vmatprep.subr.mxu0 0.0
    %1421 = vmatpush1.xpose.msra.mxu0 0.0
    %1422 = vmatprep.subr.mxu0 0.0
    %1423 = vmatpush1.xpose.msra.mxu0 0.0
    %1424 = vmatprep.subr.mxu0 0.0
    %1425 = vmatpush1.xpose.msra.mxu0 0.0
    %1426 = vmatprep.subr.mxu0 0.0
    %1427 = vmatpush1.xpose.msra.mxu0 0.0
    %1428 = vmatprep.subr.mxu0 0.0
    %1429 = vmatpush1.xpose.msra.mxu0 0.0
    %1430 = vmatprep.subr.mxu0 0.0
    %1431 = vmatpush1.xpose.msra.mxu0 0.0
    %1432 = vmatprep.subr.mxu0 0.0
    %1433 = vmatpush1.xpose.msra.mxu0 0.0
    %1434 = vmatprep.subr.mxu0 0.0
    %1435 = vmatpush1.xpose.msra.mxu0 0.0
    %1436 = vmatprep.subr.mxu0 0.0
    %1437 = vmatpush1.xpose.msra.mxu0 0.0
    %1438 = vmatprep.subr.mxu0 0.0
    %1439 = vmatpush1.xpose.msra.mxu0 0.0
    %1440 = vmatprep.subr.mxu0 0.0
    %1441 = vmatpush1.xpose.msra.mxu0 0.0
    %1442 = vmatprep.subr.mxu0 0.0
    %1443 = vmatpush1.xpose.msra.mxu0 0.0
    %1444 = vmatprep.subr.mxu0 0.0
    %1445 = vmatpush1.xpose.msra.mxu0 0.0
    %1446 = vmatprep.subr.mxu0 0.0
    %1447 = vmatpush1.xpose.msra.mxu0 0.0
    %1448 = vmatprep.subr.mxu0 0.0
    %1449 = vmatpush1.xpose.msra.mxu0 0.0
    %1450 = vmatprep.subr.mxu0 0.0
    %1451 = vmatpush1.xpose.msra.mxu0 0.0
    %1452 = vmatprep.subr.mxu0 0.0
    %1453 = vmatpush1.xpose.msra.mxu0 0.0
    %1454 = vmatprep.subr.mxu0 0.0
    %1455 = vmatpush1.xpose.msra.mxu0 0.0
    %1456 = vmatprep.subr.mxu0 0.0
    %1457 = vmatpush1.xpose.msra.mxu0 0.0
    %1458 = vmatprep.subr.mxu0 0.0
    %1459 = vmatpush1.xpose.msra.mxu0 0.0
    %1460 = vmatprep.subr.mxu0 0.0
    %1461 = vmatpush1.xpose.msra.mxu0 0.0
    %1462 = vmatprep.subr.mxu0 0.0
    %1463 = vmatpush1.xpose.msra.mxu0 0.0
    %1464 = vmatprep.subr.mxu0 0.0
    %1465 = vmatpush1.xpose.msra.mxu0 0.0
    %1466 = vmatprep.subr.mxu0 0.0
    %1467 = vmatpush1.xpose.msra.mxu0 0.0
    %1468 = vmatprep.subr.mxu0 0.0
    %1469 = vmatpush1.xpose.msra.mxu0 0.0
    %1470 = vmatprep.subr.mxu0 0.0
    %1471 = vmatpush1.xpose.msra.mxu0 0.0
    %1472 = vmatprep.subr.mxu0 0.0
    %1473 = vmatpush1.xpose.msra.mxu0 0.0
    %1474 = vmatprep.subr.mxu0 0.0
    %1475 = vmatpush1.xpose.msra.mxu0 0.0
    %1476 = vmatprep.mubr.f32.mxu0 0.0
    %1477 = vmatmul.mubr.f32.gmra.mrb[0].mxu0 %v1135
    %v1478 = vpop.f32.mrb[0].mxu0
    %v1479 = vadd.f32 0.0, %v1478
    %v1480 = vpop.f32.mrb[0].mxu0
    %1481 = vdwg.mxu0
    %v1483 = vsel %vm159, %v1220, 0
    %1485 = vmatprep.subr.mxu0 0.0
    %1486 = vmatpush1.xpose.msra.mxu0 %v1483
    %1487 = vmatprep.subr.mxu0 0.0
    %1488 = vmatpush1.xpose.msra.mxu0 0.0
    %1489 = vmatprep.subr.mxu0 0.0
    %1490 = vmatpush1.xpose.msra.mxu0 0.0
    %1491 = vmatprep.subr.mxu0 0.0
    %1492 = vmatpush1.xpose.msra.mxu0 0.0
    %1493 = vmatprep.subr.mxu0 0.0
    %1494 = vmatpush1.xpose.msra.mxu0 0.0
    %1495 = vmatprep.subr.mxu0 0.0
    %1496 = vmatpush1.xpose.msra.mxu0 0.0
    %1497 = vmatprep.subr.mxu0 0.0
    %1498 = vmatpush1.xpose.msra.mxu0 0.0
    %1499 = vmatprep.subr.mxu0 0.0
    %1500 = vmatpush1.xpose.msra.mxu0 0.0
    %1501 = vmatprep.subr.mxu0 0.0
    %1502 = vmatpush1.xpose.msra.mxu0 0.0
    %1503 = vmatprep.subr.mxu0 0.0
    %1504 = vmatpush1.xpose.msra.mxu0 0.0
    %1505 = vmatprep.subr.mxu0 0.0
    %1506 = vmatpush1.xpose.msra.mxu0 0.0
    %1507 = vmatprep.subr.mxu0 0.0
    %1508 = vmatpush1.xpose.msra.mxu0 0.0
    %1509 = vmatprep.subr.mxu0 0.0
    %1510 = vmatpush1.xpose.msra.mxu0 0.0
    %1511 = vmatprep.subr.mxu0 0.0
    %1512 = vmatpush1.xpose.msra.mxu0 0.0
    %1513 = vmatprep.subr.mxu0 0.0
    %1514 = vmatpush1.xpose.msra.mxu0 0.0
    %1515 = vmatprep.subr.mxu0 0.0
    %1516 = vmatpush1.xpose.msra.mxu0 0.0
    %1517 = vmatprep.subr.mxu0 0.0
    %1518 = vmatpush1.xpose.msra.mxu0 0.0
    %1519 = vmatprep.subr.mxu0 0.0
    %1520 = vmatpush1.xpose.msra.mxu0 0.0
    %1521 = vmatprep.subr.mxu0 0.0
    %1522 = vmatpush1.xpose.msra.mxu0 0.0
    %1523 = vmatprep.subr.mxu0 0.0
    %1524 = vmatpush1.xpose.msra.mxu0 0.0
    %1525 = vmatprep.subr.mxu0 0.0
    %1526 = vmatpush1.xpose.msra.mxu0 0.0
    %1527 = vmatprep.subr.mxu0 0.0
    %1528 = vmatpush1.xpose.msra.mxu0 0.0
    %1529 = vmatprep.subr.mxu0 0.0
    %1530 = vmatpush1.xpose.msra.mxu0 0.0
    %1531 = vmatprep.subr.mxu0 0.0
    %1532 = vmatpush1.xpose.msra.mxu0 0.0
    %1533 = vmatprep.subr.mxu0 0.0
    %1534 = vmatpush1.xpose.msra.mxu0 0.0
    %1535 = vmatprep.subr.mxu0 0.0
    %1536 = vmatpush1.xpose.msra.mxu0 0.0
    %1537 = vmatprep.subr.mxu0 0.0
    %1538 = vmatpush1.xpose.msra.mxu0 0.0
    %1539 = vmatprep.subr.mxu0 0.0
    %1540 = vmatpush1.xpose.msra.mxu0 0.0
    %1541 = vmatprep.subr.mxu0 0.0
    %1542 = vmatpush1.xpose.msra.mxu0 0.0
    %1543 = vmatprep.subr.mxu0 0.0
    %1544 = vmatpush1.xpose.msra.mxu0 0.0
    %1545 = vmatprep.subr.mxu0 0.0
    %1546 = vmatpush1.xpose.msra.mxu0 0.0
    %1547 = vmatprep.subr.mxu0 0.0
    %1548 = vmatpush1.xpose.msra.mxu0 0.0
    %1549 = vmatprep.mubr.f32.mxu0 0.0
    %1550 = vmatmul.mubr.f32.gmra.mrb[0].mxu0 %v1138
    %v1551 = vpop.f32.mrb[0].mxu0
    %v1552 = vadd.f32 0.0, %v1551
    %v1553 = vpop.f32.mrb[0].mxu0
    %1554 = vdwg.mxu0
    %v1556 = vsel %vm159, %v1225, 0
    %1558 = vmatprep.subr.mxu0 0.0
    %1559 = vmatpush1.xpose.msra.mxu0 %v1556
    %1560 = vmatprep.subr.mxu0 0.0
    %1561 = vmatpush1.xpose.msra.mxu0 0.0
    %1562 = vmatprep.subr.mxu0 0.0
    %1563 = vmatpush1.xpose.msra.mxu0 0.0
    %1564 = vmatprep.subr.mxu0 0.0
    %1565 = vmatpush1.xpose.msra.mxu0 0.0
    %1566 = vmatprep.subr.mxu0 0.0
    %1567 = vmatpush1.xpose.msra.mxu0 0.0
    %1568 = vmatprep.subr.mxu0 0.0
    %1569 = vmatpush1.xpose.msra.mxu0 0.0
    %1570 = vmatprep.subr.mxu0 0.0
    %1571 = vmatpush1.xpose.msra.mxu0 0.0
    %1572 = vmatprep.subr.mxu0 0.0
    %1573 = vmatpush1.xpose.msra.mxu0 0.0
    %1574 = vmatprep.subr.mxu0 0.0
    %1575 = vmatpush1.xpose.msra.mxu0 0.0
    %1576 = vmatprep.subr.mxu0 0.0
    %1577 = vmatpush1.xpose.msra.mxu0 0.0
    %1578 = vmatprep.subr.mxu0 0.0
    %1579 = vmatpush1.xpose.msra.mxu0 0.0
    %1580 = vmatprep.subr.mxu0 0.0
    %1581 = vmatpush1.xpose.msra.mxu0 0.0
    %1582 = vmatprep.subr.mxu0 0.0
    %1583 = vmatpush1.xpose.msra.mxu0 0.0
    %1584 = vmatprep.subr.mxu0 0.0
    %1585 = vmatpush1.xpose.msra.mxu0 0.0
    %1586 = vmatprep.subr.mxu0 0.0
    %1587 = vmatpush1.xpose.msra.mxu0 0.0
    %1588 = vmatprep.subr.mxu0 0.0
    %1589 = vmatpush1.xpose.msra.mxu0 0.0
    %1590 = vmatprep.subr.mxu0 0.0
    %1591 = vmatpush1.xpose.msra.mxu0 0.0
    %1592 = vmatprep.subr.mxu0 0.0
    %1593 = vmatpush1.xpose.msra.mxu0 0.0
    %1594 = vmatprep.subr.mxu0 0.0
    %1595 = vmatpush1.xpose.msra.mxu0 0.0
    %1596 = vmatprep.subr.mxu0 0.0
    %1597 = vmatpush1.xpose.msra.mxu0 0.0
    %1598 = vmatprep.subr.mxu0 0.0
    %1599 = vmatpush1.xpose.msra.mxu0 0.0
    %1600 = vmatprep.subr.mxu0 0.0
    %1601 = vmatpush1.xpose.msra.mxu0 0.0
    %1602 = vmatprep.subr.mxu0 0.0
    %1603 = vmatpush1.xpose.msra.mxu0 0.0
    %1604 = vmatprep.subr.mxu0 0.0
    %1605 = vmatpush1.xpose.msra.mxu0 0.0
    %1606 = vmatprep.subr.mxu0 0.0
    %1607 = vmatpush1.xpose.msra.mxu0 0.0
    %1608 = vmatprep.subr.mxu0 0.0
    %1609 = vmatpush1.xpose.msra.mxu0 0.0
    %1610 = vmatprep.subr.mxu0 0.0
    %1611 = vmatpush1.xpose.msra.mxu0 0.0
    %1612 = vmatprep.subr.mxu0 0.0
    %1613 = vmatpush1.xpose.msra.mxu0 0.0
    %1614 = vmatprep.subr.mxu0 0.0
    %1615 = vmatpush1.xpose.msra.mxu0 0.0
    %1616 = vmatprep.subr.mxu0 0.0
    %1617 = vmatpush1.xpose.msra.mxu0 0.0
    %1618 = vmatprep.subr.mxu0 0.0
    %1619 = vmatpush1.xpose.msra.mxu0 0.0
    %1620 = vmatprep.subr.mxu0 0.0
    %1621 = vmatpush1.xpose.msra.mxu0 0.0
    %1622 = vmatprep.mubr.f32.mxu0 0.0
    %1623 = vmatmul.mubr.f32.gmra.mrb[0].mxu0 %v1141
    %v1624 = vpop.f32.mrb[0].mxu0
    %v1625 = vadd.f32 0.0, %v1624
    %v1626 = vpop.f32.mrb[0].mxu0
    %1627 = vdwg.mxu0
    %v1628 = vmul.f32 %v1406, %v657
    %v1629 = vmul.f32 %v1479, %v657
    %v1630 = vmul.f32 %v1552, %v657
    %v1631 = vmul.f32 %v1625, %v657
    %vm1632 = vcmp.ne.s32.totalorder %v144, 0
    %vm1633 = vcmp.ne.s32.totalorder %v145, 0
    %vm1634 = vcmp.ne.s32.totalorder %v146, 0
    %vm1635 = vcmp.ne.s32.totalorder %v147, 0
    %v1636 = vsel %vm1632, -10000.0, %v1628
    %v1637 = vsel %vm1633, -10000.0, %v1629
    %v1638 = vsel %vm1634, -10000.0, %v1630
    %v1639 = vsel %vm1635, -10000.0, %v1631
    %v1640 = vsel %vm670, %v1636, -inf
    %1641 = vmax.xlane.f32.xlu0 %v1640
    %v1642 = vpop.xlane.xlu0 %1641
    %v1643 = vsel %vm670, %v1637, -inf
    %1644 = vmax.xlane.f32.xlu0 %v1643
    %v1645 = vpop.xlane.xlu0 %1644
    %v1646 = vsel %vm670, %v1638, -inf
    %1647 = vmax.xlane.f32.xlu0 %v1646
    %v1648 = vpop.xlane.xlu0 %1647
    %v1649 = vsel %vm670, %v1639, -inf
    %1650 = vmax.xlane.f32.xlu0 %v1649
    %v1651 = vpop.xlane.xlu0 %1650
    %v1652 = vsub.f32 %v1636, %v1642
    %v1653 = vsub.f32 %v1637, %v1645
    %v1654 = vsub.f32 %v1638, %v1648
    %v1655 = vsub.f32 %v1639, %v1651
    %v1656 = vmul.f32 %v1652, 1.442695
    %v1657 = vpow.pop %v1656
    %v1658 = vmul.f32 %v1653, 1.442695
    %v1659 = vpow.pop %v1658
    %v1660 = vmul.f32 %v1654, 1.442695
    %v1661 = vpow.pop %v1660
    %v1662 = vmul.f32 %v1655, 1.442695
    %v1663 = vpow.pop %v1662
    %v1664 = vsel %vm670, %v1657, 0.0
    %1665 = vadd.xlane.f32.xlu0 %v1664
    %v1666 = vpop.xlane.xlu0 %1665
    %v1667 = vsel %vm670, %v1659, 0.0
    %1668 = vadd.xlane.f32.xlu0 %v1667
    %v1669 = vpop.xlane.xlu0 %1668
    %v1670 = vsel %vm670, %v1661, 0.0
    %1671 = vadd.xlane.f32.xlu0 %v1670
    %v1672 = vpop.xlane.xlu0 %1671
    %v1673 = vsel %vm670, %v1663, 0.0
    %1674 = vadd.xlane.f32.xlu0 %v1673
    %v1675 = vpop.xlane.xlu0 %1674
    %v1676 = vrcp.pop %v1666
    %v1677 = vrcp.pop %v1669
    %v1678 = vrcp.pop %v1672
    %v1679 = vrcp.pop %v1675
    %v1680 = vmul.f32 %v1657, %v1676
    %v1681 = vmul.f32 %v1659, %v1677
    %v1682 = vmul.f32 %v1661, %v1678
    %v1683 = vmul.f32 %v1663, %v1679
    %v1685 = vsel %vm670, %v1680, 0
    %1687 = vmatprep.subr.mxu0 0.0
    %1688 = vmatpush1.msra.mxu0 %v1318
    %1689 = vmatprep.subr.mxu0 0.0
    %1690 = vmatpush1.msra.mxu0 0.0
    %1691 = vmatprep.subr.mxu0 0.0
    %1692 = vmatpush1.msra.mxu0 0.0
    %1693 = vmatprep.subr.mxu0 0.0
    %1694 = vmatpush1.msra.mxu0 0.0
    %1695 = vmatprep.subr.mxu0 0.0
    %1696 = vmatpush1.msra.mxu0 0.0
    %1697 = vmatprep.subr.mxu0 0.0
    %1698 = vmatpush1.msra.mxu0 0.0
    %1699 = vmatprep.subr.mxu0 0.0
    %1700 = vmatpush1.msra.mxu0 0.0
    %1701 = vmatprep.subr.mxu0 0.0
    %1702 = vmatpush1.msra.mxu0 0.0
    %1703 = vmatprep.subr.mxu0 0.0
    %1704 = vmatpush1.msra.mxu0 0.0
    %1705 = vmatprep.subr.mxu0 0.0
    %1706 = vmatpush1.msra.mxu0 0.0
    %1707 = vmatprep.subr.mxu0 0.0
    %1708 = vmatpush1.msra.mxu0 0.0
    %1709 = vmatprep.subr.mxu0 0.0
    %1710 = vmatpush1.msra.mxu0 0.0
    %1711 = vmatprep.subr.mxu0 0.0
    %1712 = vmatpush1.msra.mxu0 0.0
    %1713 = vmatprep.subr.mxu0 0.0
    %1714 = vmatpush1.msra.mxu0 0.0
    %1715 = vmatprep.subr.mxu0 0.0
    %1716 = vmatpush1.msra.mxu0 0.0
    %1717 = vmatprep.subr.mxu0 0.0
    %1718 = vmatpush1.msra.mxu0 0.0
    %1719 = vmatprep.subr.mxu0 0.0
    %1720 = vmatpush1.msra.mxu0 0.0
    %1721 = vmatprep.subr.mxu0 0.0
    %1722 = vmatpush1.msra.mxu0 0.0
    %1723 = vmatprep.subr.mxu0 0.0
    %1724 = vmatpush1.msra.mxu0 0.0
    %1725 = vmatprep.subr.mxu0 0.0
    %1726 = vmatpush1.msra.mxu0 0.0
    %1727 = vmatprep.subr.mxu0 0.0
    %1728 = vmatpush1.msra.mxu0 0.0
    %1729 = vmatprep.subr.mxu0 0.0
    %1730 = vmatpush1.msra.mxu0 0.0
    %1731 = vmatprep.subr.mxu0 0.0
    %1732 = vmatpush1.msra.mxu0 0.0
    %1733 = vmatprep.subr.mxu0 0.0
    %1734 = vmatpush1.msra.mxu0 0.0
    %1735 = vmatprep.subr.mxu0 0.0
    %1736 = vmatpush1.msra.mxu0 0.0
    %1737 = vmatprep.subr.mxu0 0.0
    %1738 = vmatpush1.msra.mxu0 0.0
    %1739 = vmatprep.subr.mxu0 0.0
    %1740 = vmatpush1.msra.mxu0 0.0
    %1741 = vmatprep.subr.mxu0 0.0
    %1742 = vmatpush1.msra.mxu0 0.0
    %1743 = vmatprep.subr.mxu0 0.0
    %1744 = vmatpush1.msra.mxu0 0.0
    %1745 = vmatprep.subr.mxu0 0.0
    %1746 = vmatpush1.msra.mxu0 0.0
    %1747 = vmatprep.subr.mxu0 0.0
    %1748 = vmatpush1.msra.mxu0 0.0
    %1749 = vmatprep.subr.mxu0 0.0
    %1750 = vmatpush1.msra.mxu0 0.0
    %1751 = vmatprep.mubr.f32.mxu0 0.0
    %1752 = vmatmul.mubr.f32.gmra.mrb[0].mxu0 %v1685
    %v1753 = vpop.f32.mrb[0].mxu0
    %v1754 = vadd.f32 0.0, %v1753
    %v1755 = vpop.f32.mrb[0].mxu0
    %1756 = vdwg.mxu0
    %v1758 = vsel %vm670, %v1681, 0
    %1760 = vmatprep.subr.mxu0 0.0
    %1761 = vmatpush1.msra.mxu0 %v1323
    %1762 = vmatprep.subr.mxu0 0.0
    %1763 = vmatpush1.msra.mxu0 0.0
    %1764 = vmatprep.subr.mxu0 0.0
    %1765 = vmatpush1.msra.mxu0 0.0
    %1766 = vmatprep.subr.mxu0 0.0
    %1767 = vmatpush1.msra.mxu0 0.0
    %1768 = vmatprep.subr.mxu0 0.0
    %1769 = vmatpush1.msra.mxu0 0.0
    %1770 = vmatprep.subr.mxu0 0.0
    %1771 = vmatpush1.msra.mxu0 0.0
    %1772 = vmatprep.subr.mxu0 0.0
    %1773 = vmatpush1.msra.mxu0 0.0
    %1774 = vmatprep.subr.mxu0 0.0
    %1775 = vmatpush1.msra.mxu0 0.0
    %1776 = vmatprep.subr.mxu0 0.0
    %1777 = vmatpush1.msra.mxu0 0.0
    %1778 = vmatprep.subr.mxu0 0.0
    %1779 = vmatpush1.msra.mxu0 0.0
    %1780 = vmatprep.subr.mxu0 0.0
    %1781 = vmatpush1.msra.mxu0 0.0
    %1782 = vmatprep.subr.mxu0 0.0
    %1783 = vmatpush1.msra.mxu0 0.0
    %1784 = vmatprep.subr.mxu0 0.0
    %1785 = vmatpush1.msra.mxu0 0.0
    %1786 = vmatprep.subr.mxu0 0.0
    %1787 = vmatpush1.msra.mxu0 0.0
    %1788 = vmatprep.subr.mxu0 0.0
    %1789 = vmatpush1.msra.mxu0 0.0
    %1790 = vmatprep.subr.mxu0 0.0
    %1791 = vmatpush1.msra.mxu0 0.0
    %1792 = vmatprep.subr.mxu0 0.0
    %1793 = vmatpush1.msra.mxu0 0.0
    %1794 = vmatprep.subr.mxu0 0.0
    %1795 = vmatpush1.msra.mxu0 0.0
    %1796 = vmatprep.subr.mxu0 0.0
    %1797 = vmatpush1.msra.mxu0 0.0
    %1798 = vmatprep.subr.mxu0 0.0
    %1799 = vmatpush1.msra.mxu0 0.0
    %1800 = vmatprep.subr.mxu0 0.0
    %1801 = vmatpush1.msra.mxu0 0.0
    %1802 = vmatprep.subr.mxu0 0.0
    %1803 = vmatpush1.msra.mxu0 0.0
    %1804 = vmatprep.subr.mxu0 0.0
    %1805 = vmatpush1.msra.mxu0 0.0
    %1806 = vmatprep.subr.mxu0 0.0
    %1807 = vmatpush1.msra.mxu0 0.0
    %1808 = vmatprep.subr.mxu0 0.0
    %1809 = vmatpush1.msra.mxu0 0.0
    %1810 = vmatprep.subr.mxu0 0.0
    %1811 = vmatpush1.msra.mxu0 0.0
    %1812 = vmatprep.subr.mxu0 0.0
    %1813 = vmatpush1.msra.mxu0 0.0
    %1814 = vmatprep.subr.mxu0 0.0
    %1815 = vmatpush1.msra.mxu0 0.0
    %1816 = vmatprep.subr.mxu0 0.0
    %1817 = vmatpush1.msra.mxu0 0.0
    %1818 = vmatprep.subr.mxu0 0.0
    %1819 = vmatpush1.msra.mxu0 0.0
    %1820 = vmatprep.subr.mxu0 0.0
    %1821 = vmatpush1.msra.mxu0 0.0
    %1822 = vmatprep.subr.mxu0 0.0
    %1823 = vmatpush1.msra.mxu0 0.0
    %1824 = vmatprep.mubr.f32.mxu0 0.0
    %1825 = vmatmul.mubr.f32.gmra.mrb[0].mxu0 %v1758
    %v1826 = vpop.f32.mrb[0].mxu0
    %v1827 = vadd.f32 0.0, %v1826
    %v1828 = vpop.f32.mrb[0].mxu0
    %1829 = vdwg.mxu0
    %v1831 = vsel %vm670, %v1682, 0
    %1833 = vmatprep.subr.mxu0 0.0
    %1834 = vmatpush1.msra.mxu0 %v1328
    %1835 = vmatprep.subr.mxu0 0.0
    %1836 = vmatpush1.msra.mxu0 0.0
    %1837 = vmatprep.subr.mxu0 0.0
    %1838 = vmatpush1.msra.mxu0 0.0
    %1839 = vmatprep.subr.mxu0 0.0
    %1840 = vmatpush1.msra.mxu0 0.0
    %1841 = vmatprep.subr.mxu0 0.0
    %1842 = vmatpush1.msra.mxu0 0.0
    %1843 = vmatprep.subr.mxu0 0.0
    %1844 = vmatpush1.msra.mxu0 0.0
    %1845 = vmatprep.subr.mxu0 0.0
    %1846 = vmatpush1.msra.mxu0 0.0
    %1847 = vmatprep.subr.mxu0 0.0
    %1848 = vmatpush1.msra.mxu0 0.0
    %1849 = vmatprep.subr.mxu0 0.0
    %1850 = vmatpush1.msra.mxu0 0.0
    %1851 = vmatprep.subr.mxu0 0.0
    %1852 = vmatpush1.msra.mxu0 0.0
    %1853 = vmatprep.subr.mxu0 0.0
    %1854 = vmatpush1.msra.mxu0 0.0
    %1855 = vmatprep.subr.mxu0 0.0
    %1856 = vmatpush1.msra.mxu0 0.0
    %1857 = vmatprep.subr.mxu0 0.0
    %1858 = vmatpush1.msra.mxu0 0.0
    %1859 = vmatprep.subr.mxu0 0.0
    %1860 = vmatpush1.msra.mxu0 0.0
    %1861 = vmatprep.subr.mxu0 0.0
    %1862 = vmatpush1.msra.mxu0 0.0
    %1863 = vmatprep.subr.mxu0 0.0
    %1864 = vmatpush1.msra.mxu0 0.0
    %1865 = vmatprep.subr.mxu0 0.0
    %1866 = vmatpush1.msra.mxu0 0.0
    %1867 = vmatprep.subr.mxu0 0.0
    %1868 = vmatpush1.msra.mxu0 0.0
    %1869 = vmatprep.subr.mxu0 0.0
    %1870 = vmatpush1.msra.mxu0 0.0
    %1871 = vmatprep.subr.mxu0 0.0
    %1872 = vmatpush1.msra.mxu0 0.0
    %1873 = vmatprep.subr.mxu0 0.0
    %1874 = vmatpush1.msra.mxu0 0.0
    %1875 = vmatprep.subr.mxu0 0.0
    %1876 = vmatpush1.msra.mxu0 0.0
    %1877 = vmatprep.subr.mxu0 0.0
    %1878 = vmatpush1.msra.mxu0 0.0
    %1879 = vmatprep.subr.mxu0 0.0
    %1880 = vmatpush1.msra.mxu0 0.0
    %1881 = vmatprep.subr.mxu0 0.0
    %1882 = vmatpush1.msra.mxu0 0.0
    %1883 = vmatprep.subr.mxu0 0.0
    %1884 = vmatpush1.msra.mxu0 0.0
    %1885 = vmatprep.subr.mxu0 0.0
    %1886 = vmatpush1.msra.mxu0 0.0
    %1887 = vmatprep.subr.mxu0 0.0
    %1888 = vmatpush1.msra.mxu0 0.0
    %1889 = vmatprep.subr.mxu0 0.0
    %1890 = vmatpush1.msra.mxu0 0.0
    %1891 = vmatprep.subr.mxu0 0.0
    %1892 = vmatpush1.msra.mxu0 0.0
    %1893 = vmatprep.subr.mxu0 0.0
    %1894 = vmatpush1.msra.mxu0 0.0
    %1895 = vmatprep.subr.mxu0 0.0
    %1896 = vmatpush1.msra.mxu0 0.0
    %1897 = vmatprep.mubr.f32.mxu0 0.0
    %1898 = vmatmul.mubr.f32.gmra.mrb[0].mxu0 %v1831
    %v1899 = vpop.f32.mrb[0].mxu0
    %v1900 = vadd.f32 0.0, %v1899
    %v1901 = vpop.f32.mrb[0].mxu0
    %1902 = vdwg.mxu0
    %v1904 = vsel %vm670, %v1683, 0
    %1906 = vmatprep.subr.mxu0 0.0
    %1907 = vmatpush1.msra.mxu0 %v1333
    %1908 = vmatprep.subr.mxu0 0.0
    %1909 = vmatpush1.msra.mxu0 0.0
    %1910 = vmatprep.subr.mxu0 0.0
    %1911 = vmatpush1.msra.mxu0 0.0
    %1912 = vmatprep.subr.mxu0 0.0
    %1913 = vmatpush1.msra.mxu0 0.0
    %1914 = vmatprep.subr.mxu0 0.0
    %1915 = vmatpush1.msra.mxu0 0.0
    %1916 = vmatprep.subr.mxu0 0.0
    %1917 = vmatpush1.msra.mxu0 0.0
    %1918 = vmatprep.subr.mxu0 0.0
    %1919 = vmatpush1.msra.mxu0 0.0
    %1920 = vmatprep.subr.mxu0 0.0
    %1921 = vmatpush1.msra.mxu0 0.0
    %1922 = vmatprep.subr.mxu0 0.0
    %1923 = vmatpush1.msra.mxu0 0.0
    %1924 = vmatprep.subr.mxu0 0.0
    %1925 = vmatpush1.msra.mxu0 0.0
    %1926 = vmatprep.subr.mxu0 0.0
    %1927 = vmatpush1.msra.mxu0 0.0
    %1928 = vmatprep.subr.mxu0 0.0
    %1929 = vmatpush1.msra.mxu0 0.0
    %1930 = vmatprep.subr.mxu0 0.0
    %1931 = vmatpush1.msra.mxu0 0.0
    %1932 = vmatprep.subr.mxu0 0.0
    %1933 = vmatpush1.msra.mxu0 0.0
    %1934 = vmatprep.subr.mxu0 0.0
    %1935 = vmatpush1.msra.mxu0 0.0
    %1936 = vmatprep.subr.mxu0 0.0
    %1937 = vmatpush1.msra.mxu0 0.0
    %1938 = vmatprep.subr.mxu0 0.0
    %1939 = vmatpush1.msra.mxu0 0.0
    %1940 = vmatprep.subr.mxu0 0.0
    %1941 = vmatpush1.msra.mxu0 0.0
    %1942 = vmatprep.subr.mxu0 0.0
    %1943 = vmatpush1.msra.mxu0 0.0
    %1944 = vmatprep.subr.mxu0 0.0
    %1945 = vmatpush1.msra.mxu0 0.0
    %1946 = vmatprep.subr.mxu0 0.0
    %1947 = vmatpush1.msra.mxu0 0.0
    %1948 = vmatprep.subr.mxu0 0.0
    %1949 = vmatpush1.msra.mxu0 0.0
    %1950 = vmatprep.subr.mxu0 0.0
    %1951 = vmatpush1.msra.mxu0 0.0
    %1952 = vmatprep.subr.mxu0 0.0
    %1953 = vmatpush1.msra.mxu0 0.0
    %1954 = vmatprep.subr.mxu0 0.0
    %1955 = vmatpush1.msra.mxu0 0.0
    %1956 = vmatprep.subr.mxu0 0.0
    %1957 = vmatpush1.msra.mxu0 0.0
    %1958 = vmatprep.subr.mxu0 0.0
    %1959 = vmatpush1.msra.mxu0 0.0
    %1960 = vmatprep.subr.mxu0 0.0
    %1961 = vmatpush1.msra.mxu0 0.0
    %1962 = vmatprep.subr.mxu0 0.0
    %1963 = vmatpush1.msra.mxu0 0.0
    %1964 = vmatprep.subr.mxu0 0.0
    %1965 = vmatpush1.msra.mxu0 0.0
    %1966 = vmatprep.subr.mxu0 0.0
    %1967 = vmatpush1.msra.mxu0 0.0
    %1968 = vmatprep.subr.mxu0 0.0
    %1969 = vmatpush1.msra.mxu0 0.0
    %1970 = vmatprep.mubr.f32.mxu0 0.0
    %1971 = vmatmul.mubr.f32.gmra.mrb[0].mxu0 %v1904
    %v1972 = vpop.f32.mrb[0].mxu0
    %v1973 = vadd.f32 0.0, %v1972
    %v1974 = vpop.f32.mrb[0].mxu0
    %1975 = vdwg.mxu0
    %v1976 = vadd.f32 %v1754, %v1112
    %v1977 = vadd.f32 %v1827, %v1113
    %v1978 = vadd.f32 %v1900, %v1114
    %v1979 = vadd.f32 %v1973, %v1115
    %v1980 = vadd.f32 %v1754, %v1116
    %v1981 = vadd.f32 %v1827, %v1117
    %v1982 = vadd.f32 %v1900, %v1118
    %v1983 = vadd.f32 %v1973, %v1119
    %v1984 = vsel %vm159, %v1976, 0.0
    %1985 = vadd.xlane.f32.xlu0 %v1984
    %v1986 = vpop.xlane.xlu0 %1985
    %v1987 = vsel %vm159, %v1977, 0.0
    %1988 = vadd.xlane.f32.xlu0 %v1987
    %v1989 = vpop.xlane.xlu0 %1988
    %v1990 = vsel %vm159, %v1978, 0.0
    %1991 = vadd.xlane.f32.xlu0 %v1990
    %v1992 = vpop.xlane.xlu0 %1991
    %v1993 = vsel %vm159, %v1979, 0.0
    %1994 = vadd.xlane.f32.xlu0 %v1993
    %v1995 = vpop.xlane.xlu0 %1994
    %v1996 = vsel %vm159, %v1980, 0.0
    %1997 = vadd.xlane.f32.xlu0 %v1996
    %v1998 = vpop.xlane.xlu0 %1997
    %v1999 = vsel %vm159, %v1981, 0.0
    %2000 = vadd.xlane.f32.xlu0 %v1999
    %v2001 = vpop.xlane.xlu0 %2000
    %v2002 = vsel %vm159, %v1982, 0.0
    %2003 = vadd.xlane.f32.xlu0 %v2002
    %v2004 = vpop.xlane.xlu0 %2003
    %v2005 = vsel %vm159, %v1983, 0.0
    %2006 = vadd.xlane.f32.xlu0 %v2005
    %v2007 = vpop.xlane.xlu0 %2006
    %v2008 = vmul.f32 %v1986, %v1039
    %v2009 = vmul.f32 %v1989, %v1039
    %v2010 = vmul.f32 %v1992, %v1039
    %v2011 = vmul.f32 %v1995, %v1039
    %v2012 = vmul.f32 %v1998, %v1039
    %v2013 = vmul.f32 %v2001, %v1039
    %v2014 = vmul.f32 %v2004, %v1039
    %v2015 = vmul.f32 %v2007, %v1039
    %v2016 = vsub.f32 %v1976, %v2008
    %v2017 = vsub.f32 %v1977, %v2009
    %v2018 = vsub.f32 %v1978, %v2010
    %v2019 = vsub.f32 %v1979, %v2011
    %v2020 = vsub.f32 %v1980, %v2012
    %v2021 = vsub.f32 %v1981, %v2013
    %v2022 = vsub.f32 %v1982, %v2014
    %v2023 = vsub.f32 %v1983, %v2015
    %v2024 = vmul.f32 %v2016, %v2016
    %v2025 = vmul.f32 %v2017, %v2017
    %v2026 = vmul.f32 %v2018, %v2018
    %v2027 = vmul.f32 %v2019, %v2019
    %v2028 = vmul.f32 %v2020, %v2020
    %v2029 = vmul.f32 %v2021, %v2021
    %v2030 = vmul.f32 %v2022, %v2022
    %v2031 = vmul.f32 %v2023, %v2023
    %v2032 = vsel %vm159, %v2024, 0.0
    %2033 = vadd.xlane.f32.xlu0 %v2032
    %v2034 = vpop.xlane.xlu0 %2033
    %v2035 = vsel %vm159, %v2025, 0.0
    %2036 = vadd.xlane.f32.xlu0 %v2035
    %v2037 = vpop.xlane.xlu0 %2036
    %v2038 = vsel %vm159, %v2026, 0.0
    %2039 = vadd.xlane.f32.xlu0 %v2038
    %v2040 = vpop.xlane.xlu0 %2039
    %v2041 = vsel %vm159, %v2027, 0.0
    %2042 = vadd.xlane.f32.xlu0 %v2041
    %v2043 = vpop.xlane.xlu0 %2042
    %v2044 = vsel %vm159, %v2028, 0.0
    %2045 = vadd.xlane.f32.xlu0 %v2044
    %v2046 = vpop.xlane.xlu0 %2045
    %v2047 = vsel %vm159, %v2029, 0.0
    %2048 = vadd.xlane.f32.xlu0 %v2047
    %v2049 = vpop.xlane.xlu0 %2048
    %v2050 = vsel %vm159, %v2030, 0.0
    %2051 = vadd.xlane.f32.xlu0 %v2050
    %v2052 = vpop.xlane.xlu0 %2051
    %v2053 = vsel %vm159, %v2031, 0.0
    %2054 = vadd.xlane.f32.xlu0 %v2053
    %v2055 = vpop.xlane.xlu0 %2054
    %v2056 = vmul.f32 %v2034, %v1039
    %v2057 = vmul.f32 %v2037, %v1039
    %v2058 = vmul.f32 %v2040, %v1039
    %v2059 = vmul.f32 %v2043, %v1039
    %v2060 = vmul.f32 %v2046, %v1039
    %v2061 = vmul.f32 %v2049, %v1039
    %v2062 = vmul.f32 %v2052, %v1039
    %v2063 = vmul.f32 %v2055, %v1039
    %v2064 = vadd.f32 %v2056, 1e-12
    %v2065 = vadd.f32 %v2057, 1e-12
    %v2066 = vadd.f32 %v2058, 1e-12
    %v2067 = vadd.f32 %v2059, 1e-12
    %v2068 = vadd.f32 %v2060, 1e-12
    %v2069 = vadd.f32 %v2061, 1e-12
    %v2070 = vadd.f32 %v2062, 1e-12
    %v2071 = vadd.f32 %v2063, 1e-12
    %v2072 = vrsqrt.pop %v2064
    %v2073 = vrsqrt.pop %v2065
    %v2074 = vrsqrt.pop %v2066
    %v2075 = vrsqrt.pop %v2067
    %v2076 = vrsqrt.pop %v2068
    %v2077 = vrsqrt.pop %v2069
    %v2078 = vrsqrt.pop %v2070
    %v2079 = vrsqrt.pop %v2071
    %v2080 = vmul.f32 %v2016, %v2072
    %v2081 = vmul.f32 %v2017, %v2073
    %v2082 = vmul.f32 %v2018, %v2074
    %v2083 = vmul.f32 %v2019, %v2075
    %v2084 = vmul.f32 %v2020, %v2076
    %v2085 = vmul.f32 %v2021, %v2077
    %v2086 = vmul.f32 %v2022, %v2078
    %v2087 = vmul.f32 %v2023, %v2079
    %v2088 = vld [vmem:[#allocation10] sm:$0xff]
    %v2089 = vld [vmem:[#allocation10 + $0x8] sm:$0xff]
    %v2090 = vld [vmem:[#allocation10 + $0x10] sm:$0xff]
    %v2091 = vld [vmem:[#allocation10 + $0x18] sm:$0xff]
    %v2092 = vld [vmem:[%s12] sm:$0x1]
    %v2094 = vlaneseq
    %v2095 = vshrl.u32 %v2094, 7
    %v2096 = vsub.s32 0, %v2095
    %v2097 = vrot.slane %v2092, %v2096
    %v2100 = vsel %vm159, %v2080, 0
    %v2103 = vsel %vm159, %v2081, 0
    %v2106 = vsel %vm159, %v2082, 0
    %v2109 = vsel %vm159, %v2083, 0
    %v2112 = vsel %vm159, %v2084, 0
    %v2115 = vsel %vm159, %v2085, 0
    %v2118 = vsel %vm159, %v2086, 0
    %v2121 = vsel %vm159, %v2087, 0
    %2123 = vmatprep.subr.mxu0 0.0
    %2124 = vmatpush1.msra.mxu0 %v2088
    %2125 = vmatprep.subr.mxu0 0.0
    %2126 = vmatpush1.msra.mxu0 %v2089
    %2127 = vmatprep.subr.mxu0 0.0
    %2128 = vmatpush1.msra.mxu0 %v2090
    %2129 = vmatprep.subr.mxu0 0.0
    %2130 = vmatpush1.msra.mxu0 %v2091
    %2131 = vmatprep.subr.mxu0 0.0
    %2132 = vmatpush1.msra.mxu0 0.0
    %2133 = vmatprep.subr.mxu0 0.0
    %2134 = vmatpush1.msra.mxu0 0.0
    %2135 = vmatprep.subr.mxu0 0.0
    %2136 = vmatpush1.msra.mxu0 0.0
    %2137 = vmatprep.subr.mxu0 0.0
    %2138 = vmatpush1.msra.mxu0 0.0
    %2139 = vmatprep.subr.mxu0 0.0
    %2140 = vmatpush1.msra.mxu0 0.0
    %2141 = vmatprep.subr.mxu0 0.0
    %2142 = vmatpush1.msra.mxu0 0.0
    %2143 = vmatprep.subr.mxu0 0.0
    %2144 = vmatpush1.msra.mxu0 0.0
    %2145 = vmatprep.subr.mxu0 0.0
    %2146 = vmatpush1.msra.mxu0 0.0
    %2147 = vmatprep.subr.mxu0 0.0
    %2148 = vmatpush1.msra.mxu0 0.0
    %2149 = vmatprep.subr.mxu0 0.0
    %2150 = vmatpush1.msra.mxu0 0.0
    %2151 = vmatprep.subr.mxu0 0.0
    %2152 = vmatpush1.msra.mxu0 0.0
    %2153 = vmatprep.subr.mxu0 0.0
    %2154 = vmatpush1.msra.mxu0 0.0
    %2155 = vmatprep.subr.mxu0 0.0
    %2156 = vmatpush1.msra.mxu0 0.0
    %2157 = vmatprep.subr.mxu0 0.0
    %2158 = vmatpush1.msra.mxu0 0.0
    %2159 = vmatprep.subr.mxu0 0.0
    %2160 = vmatpush1.msra.mxu0 0.0
    %2161 = vmatprep.subr.mxu0 0.0
    %2162 = vmatpush1.msra.mxu0 0.0
    %2163 = vmatprep.subr.mxu0 0.0
    %2164 = vmatpush1.msra.mxu0 0.0
    %2165 = vmatprep.subr.mxu0 0.0
    %2166 = vmatpush1.msra.mxu0 0.0
    %2167 = vmatprep.subr.mxu0 0.0
    %2168 = vmatpush1.msra.mxu0 0.0
    %2169 = vmatprep.subr.mxu0 0.0
    %2170 = vmatpush1.msra.mxu0 0.0
    %2171 = vmatprep.subr.mxu0 0.0
    %2172 = vmatpush1.msra.mxu0 0.0
    %2173 = vmatprep.subr.mxu0 0.0
    %2174 = vmatpush1.msra.mxu0 0.0
    %2175 = vmatprep.subr.mxu0 0.0
    %2176 = vmatpush1.msra.mxu0 0.0
    %2177 = vmatprep.subr.mxu0 0.0
    %2178 = vmatpush1.msra.mxu0 0.0
    %2179 = vmatprep.subr.mxu0 0.0
    %2180 = vmatpush1.msra.mxu0 0.0
    %2181 = vmatprep.subr.mxu0 0.0
    %2182 = vmatpush1.msra.mxu0 0.0
    %2183 = vmatprep.subr.mxu0 0.0
    %2184 = vmatpush1.msra.mxu0 0.0
    %2185 = vmatprep.subr.mxu0 0.0
    %2186 = vmatpush1.msra.mxu0 0.0
    %2187 = vmatprep.mubr.f32.mxu0 0.0
    %2188 = vmatmul.mubr.f32.gmra.mrb[0].mxu0 %v2100
    %v2189 = vpop.f32.mrb[0].mxu0
    %v2190 = vadd.f32 %v2097, %v2189
    %v2191 = vpop.f32.mrb[0].mxu0
    %2192 = vmatprep.mubr.f32.mxu0 0.0
    %2193 = vmatmul.mubr.f32.gmra.mrb[0].mxu0 %v2103
    %v2194 = vpop.f32.mrb[0].mxu0
    %v2195 = vadd.f32 %v2097, %v2194
    %v2196 = vpop.f32.mrb[0].mxu0
    %2197 = vmatprep.mubr.f32.mxu0 0.0
    %2198 = vmatmul.mubr.f32.gmra.mrb[0].mxu0 %v2106
    %v2199 = vpop.f32.mrb[0].mxu0
    %v2200 = vadd.f32 %v2097, %v2199
    %v2201 = vpop.f32.mrb[0].mxu0
    %2202 = vmatprep.mubr.f32.mxu0 0.0
    %2203 = vmatmul.mubr.f32.gmra.mrb[0].mxu0 %v2109
    %v2204 = vpop.f32.mrb[0].mxu0
    %v2205 = vadd.f32 %v2097, %v2204
    %v2206 = vpop.f32.mrb[0].mxu0
    %2207 = vmatprep.mubr.f32.mxu0 0.0
    %2208 = vmatmul.mubr.f32.gmra.mrb[0].mxu0 %v2112
    %v2209 = vpop.f32.mrb[0].mxu0
    %v2210 = vadd.f32 %v2097, %v2209
    %v2211 = vpop.f32.mrb[0].mxu0
    %2212 = vmatprep.mubr.f32.mxu0 0.0
    %2213 = vmatmul.mubr.f32.gmra.mrb[0].mxu0 %v2115
    %v2214 = vpop.f32.mrb[0].mxu0
    %v2215 = vadd.f32 %v2097, %v2214
    %v2216 = vpop.f32.mrb[0].mxu0
    %2217 = vmatprep.mubr.f32.mxu0 0.0
    %2218 = vmatmul.mubr.f32.gmra.mrb[0].mxu0 %v2118
    %v2219 = vpop.f32.mrb[0].mxu0
    %v2220 = vadd.f32 %v2097, %v2219
    %v2221 = vpop.f32.mrb[0].mxu0
    %2222 = vmatprep.mubr.f32.mxu0 0.0
    %2223 = vmatmul.mubr.f32.gmra.mrb[0].mxu0 %v2121
    %v2224 = vpop.f32.mrb[0].mxu0
    %v2225 = vadd.f32 %v2097, %v2224
    %v2226 = vpop.f32.mrb[0].mxu0
    %2227 = vdwg.mxu0
    %v2228 = vmax.f32 %v2190, 0.0
    %v2229 = vmax.f32 %v2195, 0.0
    %v2230 = vmax.f32 %v2200, 0.0
    %v2231 = vmax.f32 %v2205, 0.0
    %v2232 = vmax.f32 %v2210, 0.0
    %v2233 = vmax.f32 %v2215, 0.0
    %v2234 = vmax.f32 %v2220, 0.0
    %v2235 = vmax.f32 %v2225, 0.0
    %v2236 = vld [vmem:[%s13] sm:$0xff]
    %v2237 = vld [vmem:[%s13 + $0x8] sm:$0xff]
    %v2238 = vld [vmem:[%s13 + $0x10] sm:$0xff]
    %v2239 = vld [vmem:[%s13 + $0x18] sm:$0xff]
    %v2240 = vld [vmem:[%s13 + $0x20] sm:$0xff]
    %v2241 = vld [vmem:[%s13 + $0x28] sm:$0xff]
    %v2242 = vld [vmem:[%s13 + $0x30] sm:$0xff]
    %v2243 = vld [vmem:[%s13 + $0x38] sm:$0xff]
    %v2244 = vld [vmem:[%s14] sm:$0x1]
    %v2246 = vlaneseq
    %v2247 = vshrl.u32 %v2246, 7
    %v2248 = vsub.s32 0, %v2247
    %v2249 = vrot.slane %v2244, %v2248
    %vm2251 = vcmask 523264
    %v2253 = vsel %vm2251, %v2228, 0
    %v2256 = vsel %vm2251, %v2229, 0
    %v2259 = vsel %vm2251, %v2230, 0
    %v2262 = vsel %vm2251, %v2231, 0
    %v2265 = vsel %vm2251, %v2232, 0
    %v2268 = vsel %vm2251, %v2233, 0
    %v2271 = vsel %vm2251, %v2234, 0
    %v2274 = vsel %vm2251, %v2235, 0
    %2276 = vmatprep.subr.mxu0 0.0
    %2277 = vmatpush1.msra.mxu0 %v2236
    %2278 = vmatprep.subr.mxu0 0.0
    %2279 = vmatpush1.msra.mxu0 %v2237
    %2280 = vmatprep.subr.mxu0 0.0
    %2281 = vmatpush1.msra.mxu0 %v2238
    %2282 = vmatprep.subr.mxu0 0.0
    %2283 = vmatpush1.msra.mxu0 %v2239
    %2284 = vmatprep.subr.mxu0 0.0
    %2285 = vmatpush1.msra.mxu0 %v2240
    %2286 = vmatprep.subr.mxu0 0.0
    %2287 = vmatpush1.msra.mxu0 %v2241
    %2288 = vmatprep.subr.mxu0 0.0
    %2289 = vmatpush1.msra.mxu0 %v2242
    %2290 = vmatprep.subr.mxu0 0.0
    %2291 = vmatpush1.msra.mxu0 %v2243
    %2292 = vmatprep.subr.mxu0 0.0
    %2293 = vmatpush1.msra.mxu0 0.0
    %2294 = vmatprep.subr.mxu0 0.0
    %2295 = vmatpush1.msra.mxu0 0.0
    %2296 = vmatprep.subr.mxu0 0.0
    %2297 = vmatpush1.msra.mxu0 0.0
    %2298 = vmatprep.subr.mxu0 0.0
    %2299 = vmatpush1.msra.mxu0 0.0
    %2300 = vmatprep.subr.mxu0 0.0
    %2301 = vmatpush1.msra.mxu0 0.0
    %2302 = vmatprep.subr.mxu0 0.0
    %2303 = vmatpush1.msra.mxu0 0.0
    %2304 = vmatprep.subr.mxu0 0.0
    %2305 = vmatpush1.msra.mxu0 0.0
    %2306 = vmatprep.subr.mxu0 0.0
    %2307 = vmatpush1.msra.mxu0 0.0
    %2308 = vmatprep.subr.mxu0 0.0
    %2309 = vmatpush1.msra.mxu0 0.0
    %2310 = vmatprep.subr.mxu0 0.0
    %2311 = vmatpush1.msra.mxu0 0.0
    %2312 = vmatprep.subr.mxu0 0.0
    %2313 = vmatpush1.msra.mxu0 0.0
    %2314 = vmatprep.subr.mxu0 0.0
    %2315 = vmatpush1.msra.mxu0 0.0
    %2316 = vmatprep.subr.mxu0 0.0
    %2317 = vmatpush1.msra.mxu0 0.0
    %2318 = vmatprep.subr.mxu0 0.0
    %2319 = vmatpush1.msra.mxu0 0.0
    %2320 = vmatprep.subr.mxu0 0.0
    %2321 = vmatpush1.msra.mxu0 0.0
    %2322 = vmatprep.subr.mxu0 0.0
    %2323 = vmatpush1.msra.mxu0 0.0
    %2324 = vmatprep.subr.mxu0 0.0
    %2325 = vmatpush1.msra.mxu0 0.0
    %2326 = vmatprep.subr.mxu0 0.0
    %2327 = vmatpush1.msra.mxu0 0.0
    %2328 = vmatprep.subr.mxu0 0.0
    %2329 = vmatpush1.msra.mxu0 0.0
    %2330 = vmatprep.subr.mxu0 0.0
    %2331 = vmatpush1.msra.mxu0 0.0
    %2332 = vmatprep.subr.mxu0 0.0
    %2333 = vmatpush1.msra.mxu0 0.0
    %2334 = vmatprep.subr.mxu0 0.0
    %2335 = vmatpush1.msra.mxu0 0.0
    %2336 = vmatprep.subr.mxu0 0.0
    %2337 = vmatpush1.msra.mxu0 0.0
    %2338 = vmatprep.subr.mxu0 0.0
    %2339 = vmatpush1.msra.mxu0 0.0
    %2340 = vmatprep.mubr.f32.mxu0 0.0
    %2341 = vmatmul.mubr.f32.gmra.mrb[0].mxu0 %v2253
    %v2342 = vpop.f32.mrb[0].mxu0
    %v2343 = vadd.f32 %v2249, %v2342
    %v2344 = vpop.f32.mrb[0].mxu0
    %2345 = vmatprep.mubr.f32.mxu0 0.0
    %2346 = vmatmul.mubr.f32.gmra.mrb[0].mxu0 %v2256
    %v2347 = vpop.f32.mrb[0].mxu0
    %v2348 = vadd.f32 %v2249, %v2347
    %v2349 = vpop.f32.mrb[0].mxu0
    %2350 = vmatprep.mubr.f32.mxu0 0.0
    %2351 = vmatmul.mubr.f32.gmra.mrb[0].mxu0 %v2259
    %v2352 = vpop.f32.mrb[0].mxu0
    %v2353 = vadd.f32 %v2249, %v2352
    %v2354 = vpop.f32.mrb[0].mxu0
    %2355 = vmatprep.mubr.f32.mxu0 0.0
    %2356 = vmatmul.mubr.f32.gmra.mrb[0].mxu0 %v2262
    %v2357 = vpop.f32.mrb[0].mxu0
    %v2358 = vadd.f32 %v2249, %v2357
    %v2359 = vpop.f32.mrb[0].mxu0
    %2360 = vmatprep.mubr.f32.mxu0 0.0
    %2361 = vmatmul.mubr.f32.gmra.mrb[0].mxu0 %v2265
    %v2362 = vpop.f32.mrb[0].mxu0
    %v2363 = vadd.f32 %v2249, %v2362
    %v2364 = vpop.f32.mrb[0].mxu0
    %2365 = vmatprep.mubr.f32.mxu0 0.0
    %2366 = vmatmul.mubr.f32.gmra.mrb[0].mxu0 %v2268
    %v2367 = vpop.f32.mrb[0].mxu0
    %v2368 = vadd.f32 %v2249, %v2367
    %v2369 = vpop.f32.mrb[0].mxu0
    %2370 = vmatprep.mubr.f32.mxu0 0.0
    %2371 = vmatmul.mubr.f32.gmra.mrb[0].mxu0 %v2271
    %v2372 = vpop.f32.mrb[0].mxu0
    %v2373 = vadd.f32 %v2249, %v2372
    %v2374 = vpop.f32.mrb[0].mxu0
    %2375 = vmatprep.mubr.f32.mxu0 0.0
    %2376 = vmatmul.mubr.f32.gmra.mrb[0].mxu0 %v2274
    %v2377 = vpop.f32.mrb[0].mxu0
    %v2378 = vadd.f32 %v2249, %v2377
    %v2379 = vpop.f32.mrb[0].mxu0
    %2380 = vdwg.mxu0
    %v2381 = vadd.f32 %v2343, %v2080
    %v2382 = vadd.f32 %v2348, %v2081
    %v2383 = vadd.f32 %v2353, %v2082
    %v2384 = vadd.f32 %v2358, %v2083
    %v2385 = vadd.f32 %v2363, %v2084
    %v2386 = vadd.f32 %v2368, %v2085
    %v2387 = vadd.f32 %v2373, %v2086
    %v2388 = vadd.f32 %v2378, %v2087
    %v2389 = vsel %vm159, %v2381, 0.0
    %2390 = vadd.xlane.f32.xlu0 %v2389
    %v2391 = vpop.xlane.xlu0 %2390
    %v2392 = vsel %vm159, %v2382, 0.0
    %2393 = vadd.xlane.f32.xlu0 %v2392
    %v2394 = vpop.xlane.xlu0 %2393
    %v2395 = vsel %vm159, %v2383, 0.0
    %2396 = vadd.xlane.f32.xlu0 %v2395
    %v2397 = vpop.xlane.xlu0 %2396
    %v2398 = vsel %vm159, %v2384, 0.0
    %2399 = vadd.xlane.f32.xlu0 %v2398
    %v2400 = vpop.xlane.xlu0 %2399
    %v2401 = vsel %vm159, %v2385, 0.0
    %2402 = vadd.xlane.f32.xlu0 %v2401
    %v2403 = vpop.xlane.xlu0 %2402
    %v2404 = vsel %vm159, %v2386, 0.0
    %2405 = vadd.xlane.f32.xlu0 %v2404
    %v2406 = vpop.xlane.xlu0 %2405
    %v2407 = vsel %vm159, %v2387, 0.0
    %2408 = vadd.xlane.f32.xlu0 %v2407
    %v2409 = vpop.xlane.xlu0 %2408
    %v2410 = vsel %vm159, %v2388, 0.0
    %2411 = vadd.xlane.f32.xlu0 %v2410
    %v2412 = vpop.xlane.xlu0 %2411
    %v2413 = vmul.f32 %v2391, %v1039
    %v2414 = vmul.f32 %v2394, %v1039
    %v2415 = vmul.f32 %v2397, %v1039
    %v2416 = vmul.f32 %v2400, %v1039
    %v2417 = vmul.f32 %v2403, %v1039
    %v2418 = vmul.f32 %v2406, %v1039
    %v2419 = vmul.f32 %v2409, %v1039
    %v2420 = vmul.f32 %v2412, %v1039
    %v2421 = vsub.f32 %v2381, %v2413
    %v2422 = vsub.f32 %v2382, %v2414
    %v2423 = vsub.f32 %v2383, %v2415
    %v2424 = vsub.f32 %v2384, %v2416
    %v2425 = vsub.f32 %v2385, %v2417
    %v2426 = vsub.f32 %v2386, %v2418
    %v2427 = vsub.f32 %v2387, %v2419
    %v2428 = vsub.f32 %v2388, %v2420
    %v2429 = vmul.f32 %v2421, %v2421
    %v2430 = vmul.f32 %v2422, %v2422
    %v2431 = vmul.f32 %v2423, %v2423
    %v2432 = vmul.f32 %v2424, %v2424
    %v2433 = vmul.f32 %v2425, %v2425
    %v2434 = vmul.f32 %v2426, %v2426
    %v2435 = vmul.f32 %v2427, %v2427
    %v2436 = vmul.f32 %v2428, %v2428
    %v2437 = vsel %vm159, %v2429, 0.0
    %2438 = vadd.xlane.f32.xlu0 %v2437
    %v2439 = vpop.xlane.xlu0 %2438
    %v2440 = vsel %vm159, %v2430, 0.0
    %2441 = vadd.xlane.f32.xlu0 %v2440
    %v2442 = vpop.xlane.xlu0 %2441
    %v2443 = vsel %vm159, %v2431, 0.0
    %2444 = vadd.xlane.f32.xlu0 %v2443
    %v2445 = vpop.xlane.xlu0 %2444
    %v2446 = vsel %vm159, %v2432, 0.0
    %2447 = vadd.xlane.f32.xlu0 %v2446
    %v2448 = vpop.xlane.xlu0 %2447
    %v2449 = vsel %vm159, %v2433, 0.0
    %2450 = vadd.xlane.f32.xlu0 %v2449
    %v2451 = vpop.xlane.xlu0 %2450
    %v2452 = vsel %vm159, %v2434, 0.0
    %2453 = vadd.xlane.f32.xlu0 %v2452
    %v2454 = vpop.xlane.xlu0 %2453
    %v2455 = vsel %vm159, %v2435, 0.0
    %2456 = vadd.xlane.f32.xlu0 %v2455
    %v2457 = vpop.xlane.xlu0 %2456
    %v2458 = vsel %vm159, %v2436, 0.0
    %2459 = vadd.xlane.f32.xlu0 %v2458
    %v2460 = vpop.xlane.xlu0 %2459
    %v2461 = vmul.f32 %v2439, %v1039
    %v2462 = vmul.f32 %v2442, %v1039
    %v2463 = vmul.f32 %v2445, %v1039
    %v2464 = vmul.f32 %v2448, %v1039
    %v2465 = vmul.f32 %v2451, %v1039
    %v2466 = vmul.f32 %v2454, %v1039
    %v2467 = vmul.f32 %v2457, %v1039
    %v2468 = vmul.f32 %v2460, %v1039
    %v2469 = vadd.f32 %v2461, 1e-12
    %v2470 = vadd.f32 %v2462, 1e-12
    %v2471 = vadd.f32 %v2463, 1e-12
    %v2472 = vadd.f32 %v2464, 1e-12
    %v2473 = vadd.f32 %v2465, 1e-12
    %v2474 = vadd.f32 %v2466, 1e-12
    %v2475 = vadd.f32 %v2467, 1e-12
    %v2476 = vadd.f32 %v2468, 1e-12
    %v2477 = vrsqrt.pop %v2469
    %v2478 = vrsqrt.pop %v2470
    %v2479 = vrsqrt.pop %v2471
    %v2480 = vrsqrt.pop %v2472
    %v2481 = vrsqrt.pop %v2473
    %v2482 = vrsqrt.pop %v2474
    %v2483 = vrsqrt.pop %v2475
    %v2484 = vrsqrt.pop %v2476
    %v2485 = vmul.f32 %v2421, %v2477
    %v2486 = vmul.f32 %v2422, %v2478
    %v2487 = vmul.f32 %v2423, %v2479
    %v2488 = vmul.f32 %v2424, %v2480
    %v2489 = vmul.f32 %v2425, %v2481
    %v2490 = vmul.f32 %v2426, %v2482
    %v2491 = vmul.f32 %v2427, %v2483
    %v2492 = vmul.f32 %v2428, %v2484
    %2493 = vst.msk [vmem:[%s15] sm:$0xff] %vm159, %v2485
    %2494 = vst.msk [vmem:[%s15 + $0x8] sm:$0xff] %vm159, %v2486
    %2495 = vst.msk [vmem:[%s15 + $0x10] sm:$0xff] %vm159, %v2487
    %2496 = vst.msk [vmem:[%s15 + $0x18] sm:$0xff] %vm159, %v2488
    %2497 = vst.msk [vmem:[%s15 + $0x20] sm:$0xff] %vm159, %v2489
    %2498 = vst.msk [vmem:[%s15 + $0x28] sm:$0xff] %vm159, %v2490
    %2499 = vst.msk [vmem:[%s15 + $0x30] sm:$0xff] %vm159, %v2491
    %2500 = vst.msk [vmem:[%s15 + $0x38] sm:$0xff] %vm159, %v2492
    // Predicated region
    $region86: #{tpu_custom_call.1} parent=1 // pred_check
      _
    $region87: #{tpu_custom_call.1} parent=1 // pred_check_branch
      %2502 = sbr.rel (0) target = $region89
    $region88: #{tpu_custom_call.1} parent=1 // pred_region
      _
    $region89: #{tpu_custom_call.1} parent=1 // pred_fallthru
      _
    // Predicated region
    $region90: #{tpu_custom_call.1} parent=1 // pred_check
      _
    $region91: #{tpu_custom_call.1} parent=1 // pred_check_branch
      %2504 = sbr.rel (0) target = $region93
    $region92: #{tpu_custom_call.1} parent=1 // pred_region
      _
    $region93: #{tpu_custom_call.1} parent=1 // pred_fallthru
      _
    %2505 = vsyncpa [#allocation3], 1
    %2506 = vsyncpa [#allocation5], 1
    %2507 = vsyncpa [#allocation8], 1
    %2508 = vsyncpa [#allocation11], 1

</llo_original>
